<compile_context>
chip_gen: v7x
topology: tpu7x:2x2x1
jax: 0.10.0
libtpu: 0.0.40
codegen_flags: <defaults>
</compile_context>

<pallas_src>
import jax
import jax.numpy as jnp
from jax.experimental import pallas as pl
from jax.experimental.pallas import tpu as pltpu

# ----------------------------- configuration -----------------------------
B       = 2          # batch
C_IN    = 3          # image channels
RES     = 16         # input resolution (self.input_resolution)
PATCH   = 8          # patch size
GRIDSZ  = RES // PATCH
N_PATCH = GRIDSZ * GRIDSZ          # 4
T       = N_PATCH + 1              # 5 tokens (cls + patches)
BT      = B * T                    # 10 token rows for the whole batch
D       = 32                       # transformer width
H       = 4                        # attention heads
HD      = D // H                   # head dim
HBT     = H * BT                   # 40 head-packed rows
L       = 2                        # transformer layers
MLP     = 4 * D                    # mlp hidden (= 128, exactly lane-dense)
OUT     = 24                       # output embedding dim (visual.proj)
LANE    = 128                      # lane width of the coalesced slabs
P       = C_IN * PATCH * PATCH     # flattened patch size = 192
EPS     = 1e-5

# misc-slab sublane offsets (all 8-aligned)
MISC_POS   = 0                     # rows 0:BT      pos (+cls folded on rows 0..B-1)
MISC_LN    = 16                    # rows 16:20     ln_pre_g, ln_pre_b, ln_post_g, ln_post_b
MISC_HMASK = 24                    # rows 24:64     head lane mask        [HBT, D]
MISC_AMASK = MISC_HMASK + HBT      # rows 64:104    head+image block mask [HBT, HBT]
MISC_PROJ  = MISC_AMASK + HBT      # rows 104:136   visual proj           [D, LANE]
MISC_VEC   = MISC_PROJ + D         # rows 136:152   per-layer LN/bias vectors [L*8, LANE]
MISC_ROWS  = MISC_VEC + L * 8      # 152


def _layernorm(x, g, b):
    mu = jnp.mean(x, axis=-1, keepdims=True)
    var = jnp.mean((x - mu) ** 2, axis=-1, keepdims=True)
    return (x - mu) * jax.lax.rsqrt(var + EPS) * g + b


# ------------------------------- the kernel -------------------------------
def vit_kernel(patches_ref, wpatch_ref, misc_ref, wstack_ref, w2_ref, out_ref):
    # ---- patch embedding (conv as one matmul over all B*T rows; cls rows are zero patches)
    x = jnp.dot(patches_ref[...], wpatch_ref[...],
                preferred_element_type=jnp.float32)                 # [BT, D]
    x = x + misc_ref[MISC_POS:MISC_POS + BT, 0:D]                   # + pos (+cls on rows 0..B-1)

    ln_pre_g  = misc_ref[MISC_LN + 0:MISC_LN + 1, 0:D]
    ln_pre_b  = misc_ref[MISC_LN + 1:MISC_LN + 2, 0:D]
    ln_post_g = misc_ref[MISC_LN + 2:MISC_LN + 3, 0:D]
    ln_post_b = misc_ref[MISC_LN + 3:MISC_LN + 4, 0:D]
    x = _layernorm(x, ln_pre_g, ln_pre_b)

    hmask = misc_ref[MISC_HMASK:MISC_HMASK + HBT, 0:D]              # [HBT, D]
    amask = misc_ref[MISC_AMASK:MISC_AMASK + HBT, 0:HBT]            # [HBT, HBT]

    # ---- pre-norm transformer blocks (statically unrolled; L is tiny) ----
    for l in range(L):
        wl = wstack_ref[l]                                          # [3*D, LANE]
        vl = misc_ref[MISC_VEC + l * 8:MISC_VEC + (l + 1) * 8, :]   # [8, LANE]
        ln1_g, ln1_b = vl[0:1, 0:D], vl[1:2, 0:D]
        ln2_g, ln2_b = vl[2:3, 0:D], vl[3:4, 0:D]
        bqkv, bo     = vl[4:5, :],   vl[5:6, 0:D]
        b1,   b2     = vl[6:7, :],   vl[7:8, 0:D]

        # -- block-diagonal multi-head attention (Q scale pre-folded into wqkv/bqkv) --
        h_in = _layernorm(x, ln1_g, ln1_b)
        qkv = jnp.dot(h_in, wl[0:D, :],
                      preferred_element_type=jnp.float32) + bqkv    # [BT, LANE]; lanes 96:+ are 0
        q, k, v = qkv[:, 0:D], qkv[:, D:2 * D], qkv[:, 2 * D:3 * D]
        qp = jnp.concatenate([q] * H, axis=0) * hmask               # [HBT, D] head-lane masked
        kp = jnp.concatenate([k] * H, axis=0)                       # [HBT, D]
        vp = jnp.concatenate([v] * H, axis=0) * hmask               # [HBT, D]

        s = jax.lax.dot_general(qp, kp, (((1,), (1,)), ((), ())),
                                preferred_element_type=jnp.float32) + amask   # [HBT, HBT]
        s = s - jnp.max(s, axis=-1, keepdims=True)
        e = jnp.exp(s)
        a = e * pl.reciprocal(jnp.sum(e, axis=-1, keepdims=True), approx=True)
        op = jnp.dot(a, vp, preferred_element_type=jnp.float32)     # [HBT, D]
        att = op[0:BT]                                              # sum the H sublane blocks
        for h in range(1, H):
            att = att + op[h * BT:(h + 1) * BT]                     # [BT, D] = concat'd heads
        x = x + jnp.dot(att, wl[D:2 * D, 0:D],
                        preferred_element_type=jnp.float32) + bo

        # -- MLP --
        h2 = _layernorm(x, ln2_g, ln2_b)
        h2 = jnp.dot(h2, wl[2 * D:3 * D, :],
                     preferred_element_type=jnp.float32) + b1       # [BT, MLP]
        # TODO(synk): OpenCLIP uses exact erf-based nn.GELU; tanh-approx GELU used here.
        h2 = jax.nn.gelu(h2, approximate=True)
        h2 = jnp.dot(h2, w2_ref[l], preferred_element_type=jnp.float32) + b2
        x = x + h2

    # ---- ln_post + visual projection on the B class-token rows only ----
    pooled = _layernorm(x[0:B, :], ln_post_g, ln_post_b)            # [B, D]
    emb = jnp.dot(pooled, misc_ref[MISC_PROJ:MISC_PROJ + D, :],
                  preferred_element_type=jnp.float32)               # [B, LANE]
    out_ref[...] = emb[:, 0:OUT]                                    # [B, OUT]


# --------------------- one-time (hoisted) parameter packing ---------------------
def _pad2(a, rows, lanes=LANE):
    return jnp.pad(a, ((0, rows - a.shape[0]), (0, lanes - a.shape[1])))


def prepare_params(params):
    """Weight-only packing; call ONCE, off the per-image hot path."""
    (wpatch, cls, pos, ln_pre_g, ln_pre_b,
     ln1_g, ln1_b, wqkv, bqkv, wo, bo,
     ln2_g, ln2_b, w1, b1, w2, b2,
     ln_post_g, ln_post_b, proj) = params

    # fold the 1/sqrt(HD) attention scale into the Q columns of wqkv / bqkv
    scale = 1.0 / jnp.sqrt(jnp.float32(HD))
    wqkv_s = wqkv.at[:, :, :D].multiply(scale)
    bqkv_s = bqkv.at[:, :, :D].multiply(scale)

    # token layout: rows 0..B-1 are the class tokens, then B blocks of N_PATCH patch rows
    pos_cls = pos[0:1] + cls                                        # cls embedding folded in
    pos_rows = jnp.concatenate([jnp.tile(pos_cls, (B, 1)),
                                jnp.tile(pos[1:], (B, 1))], axis=0)          # [BT, D]

    ln_outer = jnp.concatenate([ln_pre_g, ln_pre_b, ln_post_g, ln_post_b], 0)  # [4, D]

    # head lane mask: packed row h*BT+t keeps only head h's lanes
    head_of_row  = jnp.arange(HBT) // BT
    head_of_lane = jnp.arange(D) // HD
    hmask = (head_of_row[:, None] == head_of_lane[None, :]).astype(jnp.float32)  # [HBT, D]

    # additive head-and-image block-diagonal mask
    img_id  = jnp.concatenate([jnp.arange(B), jnp.repeat(jnp.arange(B), N_PATCH)])  # [BT]
    row_img = img_id[jnp.arange(HBT) % BT]
    same = (head_of_row[:, None] == head_of_row[None, :]) & \
           (row_img[:, None] == row_img[None, :])
    amask = jnp.where(same, 0.0, -1e9).astype(jnp.float32)                          # [HBT, HBT]

    # per-layer 1-row vectors packed as [L*8, LANE]
    def _pl(v):
        return jnp.pad(v, ((0, 0), (0, 0), (0, LANE - v.shape[-1])))
    vecs = jnp.concatenate([_pl(ln1_g), _pl(ln1_b), _pl(ln2_g), _pl(ln2_b),
                            _pl(bqkv_s), _pl(bo), _pl(b1), _pl(b2)], axis=1)  # [L, 8, LANE]

    misc = jnp.concatenate([
        _pad2(pos_rows, MISC_LN - MISC_POS),      # rows 0:16
        _pad2(ln_outer, MISC_HMASK - MISC_LN),    # rows 16:24
        _pad2(hmask, HBT),                        # rows 24:64
        _pad2(amask, HBT),                        # rows 64:104
        _pad2(proj, D),                           # rows 104:136
        vecs.reshape(L * 8, LANE),                # rows 136:152
    ], axis=0)                                    # [MISC_ROWS, LANE]

    # per-layer matrices, lane padded to 128 and sublane-stacked: [wqkv | wo | w1]
    def _plm(m):
        return jnp.pad(m, ((0, 0), (0, 0), (0, LANE - m.shape[-1])))
    wstack = jnp.concatenate([_plm(wqkv_s), _plm(wo), w1], axis=1)   # [L, 3*D, LANE]

    return (wpatch, misc, wstack, w2)


# ------------------------------ per-call wrapper ------------------------------
def _fullspec(shape):
    nd = len(shape)
    return pl.BlockSpec(shape, lambda i, _nd=nd: (0,) * _nd)


def clip_image_embed(image, packed):
    """image: [B, C_IN, RES, RES] float32 (NCHW). Returns [B, OUT] float32."""
    wpatch, misc, wstack, w2 = packed

    # im2col glue (the only per-call preprocessing):
    # [B,C,gh,ph,gw,pw] -> [B,gh,gw,C,ph,pw] -> [B*N_PATCH, P]; prepend B zero rows (cls).
    xr = image.reshape(B, C_IN, GRIDSZ, PATCH, GRIDSZ, PATCH)
    patches = xr.transpose(0, 2, 4, 1, 3, 5).reshape(B * N_PATCH, P)
    patches = jnp.concatenate([jnp.zeros((B, P), jnp.float32), patches], axis=0)  # [BT, P]

    ops = (patches, wpatch, misc, wstack, w2)
    return pl.pallas_call(
        vit_kernel,
        out_shape=jax.ShapeDtypeStruct((B, OUT), jnp.float32),
        grid=(1,),
        in_specs=[_fullspec(o.shape) for o in ops],
        out_specs=_fullspec((B, OUT)),
        compiler_params=pltpu.CompilerParams(
            dimension_semantics=("arbitrary",),
            # allow the im2col producer of `patches` to fuse into the pallas call
            allow_input_fusion=[True, False, False, False, False]),
    )(*ops)


# ------------------------------ reference (pure JAX) ------------------------------
def _reference(image, params):
    (wpatch, cls, pos, ln_pre_g, ln_pre_b,
     ln1_g, ln1_b, wqkv, bqkv, wo, bo,
     ln2_g, ln2_b, w1, b1, w2, b2,
     ln_post_g, ln_post_b, proj) = params

    x = image.reshape(B, C_IN, GRIDSZ, PATCH, GRIDSZ, PATCH)
    patches = x.transpose(0, 2, 4, 1, 3, 5).reshape(B, N_PATCH, P)

    outs = []
    for b in range(B):
        xb = patches[b] @ wpatch
        xb = jnp.concatenate([cls, xb], axis=0) + pos
        xb = _layernorm(xb, ln_pre_g, ln_pre_b)
        scale = 1.0 / jnp.sqrt(jnp.float32(HD))
        for l in range(L):
            h_in = _layernorm(xb, ln1_g[l], ln1_b[l])
            qkv = h_in @ wqkv[l] + bqkv[l]
            q, k, v = qkv[:, :D], qkv[:, D:2 * D], qkv[:, 2 * D:]
            heads = []
            for h in range(H):
                qh = q[:, h * HD:(h + 1) * HD] * scale
                kh = k[:, h * HD:(h + 1) * HD]
                vh = v[:, h * HD:(h + 1) * HD]
                s = qh @ kh.T
                a = jax.nn.softmax(s, axis=-1)
                heads.append(a @ vh)
            att = jnp.concatenate(heads, axis=-1) @ wo[l] + bo[l]
            xb = xb + att
            h2 = _layernorm(xb, ln2_g[l], ln2_b[l])
            h2 = jax.nn.gelu(h2 @ w1[l] + b1[l], approximate=True)
            xb = xb + h2 @ w2[l] + b2[l]
        pooled = _layernorm(xb[0:1], ln_post_g, ln_post_b)
        outs.append(pooled @ proj)
    return jnp.concatenate(outs, axis=0)


# ------------------------------ parameter init ------------------------------
def make_params(key):
    keys = jax.random.split(key, 16)
    n = lambda k, shape, s=0.02: (jax.random.normal(k, shape, jnp.float32) * s)
    wpatch    = n(keys[0], (P, D))
    cls       = n(keys[1], (1, D))
    pos       = n(keys[2], (T, D))
    ln_pre_g  = jnp.ones((1, D), jnp.float32)
    ln_pre_b  = jnp.zeros((1, D), jnp.float32)
    ln1_g     = jnp.ones((L, 1, D), jnp.float32)
    ln1_b     = jnp.zeros((L, 1, D), jnp.float32)
    wqkv      = n(keys[3], (L, D, 3 * D))
    bqkv      = n(keys[4], (L, 1, 3 * D), 0.01)
    wo        = n(keys[5], (L, D, D))
    bo        = n(keys[6], (L, 1, D), 0.01)
    ln2_g     = jnp.ones((L, 1, D), jnp.float32)
    ln2_b     = jnp.zeros((L, 1, D), jnp.float32)
    w1        = n(keys[7], (L, D, MLP))
    b1        = n(keys[8], (L, 1, MLP), 0.01)
    w2        = n(keys[9], (L, MLP, D))
    b2        = n(keys[10], (L, 1, D), 0.01)
    ln_post_g = jnp.ones((1, D), jnp.float32)
    ln_post_b = jnp.zeros((1, D), jnp.float32)
    proj      = n(keys[11], (D, OUT))
    return (wpatch, cls, pos, ln_pre_g, ln_pre_b,
            ln1_g, ln1_b, wqkv, bqkv, wo, bo,
            ln2_g, ln2_b, w1, b1, w2, b2,
            ln_post_g, ln_post_b, proj)


if __name__ == "__main__":
    key = jax.random.PRNGKey(0)
    k_img, k_par = jax.random.split(key)
    image = jax.random.normal(k_img, (B, C_IN, RES, RES), jnp.float32)  # NCHW
    params = make_params(k_par)

    # one-time, hoisted weight packing (NOT part of the per-image hot path)
    packed = jax.tree_util.tree_map(jax.block_until_ready, prepare_params(params))

    embed_fn = jax.jit(clip_image_embed)
    out = jax.block_until_ready(embed_fn(image, packed))

    ref = _reference(image, params)
    assert out.shape == (B, OUT), out.shape
    assert jnp.allclose(out, ref, atol=5e-4, rtol=5e-4), \
        f"max abs err {jnp.max(jnp.abs(out - ref))}"

    print("KERNEL_OK")
</pallas_src>

<mosaic_0001>
module attributes {stable_mosaic.version = 11 : i64} {
  func.func @vit_kernel(%arg0: i32, %arg1: memref<10x192xf32, #tpu.memory_space<vmem>>, %arg2: memref<192x32xf32, #tpu.memory_space<vmem>>, %arg3: memref<152x128xf32, #tpu.memory_space<vmem>>, %arg4: memref<2x96x128xf32, #tpu.memory_space<vmem>>, %arg5: memref<2x128x32xf32, #tpu.memory_space<vmem>>, %arg6: memref<2x24xf32, #tpu.memory_space<vmem>>) attributes {dimension_semantics = [#tpu.dimension_semantics<arbitrary>], iteration_bounds = array<i64: 1>, scalar_prefetch = 0 : i64, scratch_operands = 0 : i64, tpu.core_type = #tpu.core_type<tc>, window_params = [{pipeline_mode = #tpu.pipeline_mode<synchronous>, transform_indices = @transform_0, window_bounds = array<i64: 10, 192>}, {pipeline_mode = #tpu.pipeline_mode<synchronous>, transform_indices = @transform_1, window_bounds = array<i64: 192, 32>}, {pipeline_mode = #tpu.pipeline_mode<synchronous>, transform_indices = @transform_2, window_bounds = array<i64: 152, 128>}, {pipeline_mode = #tpu.pipeline_mode<synchronous>, transform_indices = @transform_3, window_bounds = array<i64: 2, 96, 128>}, {pipeline_mode = #tpu.pipeline_mode<synchronous>, transform_indices = @transform_4, window_bounds = array<i64: 2, 128, 32>}, {pipeline_mode = #tpu.pipeline_mode<synchronous>, transform_indices = @transform_5, window_bounds = array<i64: 2, 24>}]} {
    %c0 = arith.constant 0 : index
    %c0_0 = arith.constant 0 : index
    %0 = vector.load %arg1[%c0, %c0_0] : memref<10x192xf32, #tpu.memory_space<vmem>>, vector<10x192xf32>
    %c0_1 = arith.constant 0 : index
    %c0_2 = arith.constant 0 : index
    %1 = vector.load %arg2[%c0_1, %c0_2] : memref<192x32xf32, #tpu.memory_space<vmem>>, vector<192x32xf32>
    %cst = arith.constant dense<0.000000e+00> : vector<10x32xf32>
    %2 = tpu.matmul %0, %1, %cst {dimension_numbers = #tpu.dot_dimension_numbers<[1], [0], [0], [1], [0, 0, 1, 1], [], []>} : vector<10x192xf32>, vector<192x32xf32>, vector<10x32xf32> -> vector<10x32xf32>
    %c0_3 = arith.constant 0 : index
    %c0_4 = arith.constant 0 : index
    %3 = vector.load %arg3[%c0_3, %c0_4] : memref<152x128xf32, #tpu.memory_space<vmem>>, vector<10x32xf32>
    %4 = arith.addf %2, %3 : vector<10x32xf32>
    %c16 = arith.constant 16 : index
    %c0_5 = arith.constant 0 : index
    %5 = vector.load %arg3[%c16, %c0_5] : memref<152x128xf32, #tpu.memory_space<vmem>>, vector<1x32xf32>
    %c17 = arith.constant 17 : index
    %c0_6 = arith.constant 0 : index
    %6 = vector.load %arg3[%c17, %c0_6] : memref<152x128xf32, #tpu.memory_space<vmem>>, vector<1x32xf32>
    %c18 = arith.constant 18 : index
    %c0_7 = arith.constant 0 : index
    %7 = vector.load %arg3[%c18, %c0_7] : memref<152x128xf32, #tpu.memory_space<vmem>>, vector<1x32xf32>
    %c19 = arith.constant 19 : index
    %c0_8 = arith.constant 0 : index
    %8 = vector.load %arg3[%c19, %c0_8] : memref<152x128xf32, #tpu.memory_space<vmem>>, vector<1x32xf32>
    %cst_9 = arith.constant dense<0.000000e+00> : vector<10xf32>
    %9 = vector.multi_reduction <add>, %4, %cst_9 [1] : vector<10x32xf32> to vector<10xf32>
    %10 = vector.shape_cast %9 : vector<10xf32> to vector<10x1xf32>
    %cst_10 = arith.constant 3.200000e+01 : f32
    %11 = vector.broadcast %cst_10 : f32 to vector<10x1xf32>
    %12 = arith.divf %10, %11 : vector<10x1xf32>
    %13 = vector.broadcast %12 : vector<10x1xf32> to vector<10x32xf32>
    %14 = arith.subf %4, %13 : vector<10x32xf32>
    %15 = arith.mulf %14, %14 : vector<10x32xf32>
    %cst_11 = arith.constant dense<0.000000e+00> : vector<10xf32>
    %16 = vector.multi_reduction <add>, %15, %cst_11 [1] : vector<10x32xf32> to vector<10xf32>
    %17 = vector.shape_cast %16 : vector<10xf32> to vector<10x1xf32>
    %cst_12 = arith.constant 3.200000e+01 : f32
    %18 = vector.broadcast %cst_12 : f32 to vector<10x1xf32>
    %19 = arith.divf %17, %18 : vector<10x1xf32>
    %20 = vector.broadcast %12 : vector<10x1xf32> to vector<10x32xf32>
    %21 = arith.subf %4, %20 : vector<10x32xf32>
    %cst_13 = arith.constant 9.99999974E-6 : f32
    %22 = vector.broadcast %cst_13 : f32 to vector<10x1xf32>
    %23 = arith.addf %19, %22 : vector<10x1xf32>
    %24 = math.rsqrt %23 : vector<10x1xf32>
    %25 = vector.broadcast %24 : vector<10x1xf32> to vector<10x32xf32>
    %26 = arith.mulf %21, %25 : vector<10x32xf32>
    %27 = vector.broadcast %5 : vector<1x32xf32> to vector<10x32xf32>
    %28 = arith.mulf %26, %27 : vector<10x32xf32>
    %29 = vector.broadcast %6 : vector<1x32xf32> to vector<10x32xf32>
    %30 = arith.addf %28, %29 : vector<10x32xf32>
    %c24 = arith.constant 24 : index
    %c0_14 = arith.constant 0 : index
    %31 = vector.load %arg3[%c24, %c0_14] : memref<152x128xf32, #tpu.memory_space<vmem>>, vector<40x32xf32>
    %c64 = arith.constant 64 : index
    %c0_15 = arith.constant 0 : index
    %32 = vector.load %arg3[%c64, %c0_15] : memref<152x128xf32, #tpu.memory_space<vmem>>, vector<40x40xf32>
    %c0_16 = arith.constant 0 : index
    %c0_17 = arith.constant 0 : index
    %c0_18 = arith.constant 0 : index
    %33 = vector.load %arg4[%c0_16, %c0_17, %c0_18] : memref<2x96x128xf32, #tpu.memory_space<vmem>>, vector<1x96x128xf32>
    %34 = vector.shape_cast %33 : vector<1x96x128xf32> to vector<96x128xf32>
    %c136 = arith.constant 136 : index
    %c0_19 = arith.constant 0 : index
    %35 = vector.load %arg3[%c136, %c0_19] : memref<152x128xf32, #tpu.memory_space<vmem>>, vector<8x128xf32>
    %36 = vector.extract_strided_slice %35 {offsets = [0, 0], sizes = [1, 32], strides = [1, 1]} : vector<8x128xf32> to vector<1x32xf32>
    %37 = vector.extract_strided_slice %35 {offsets = [1, 0], sizes = [1, 32], strides = [1, 1]} : vector<8x128xf32> to vector<1x32xf32>
    %38 = vector.extract_strided_slice %35 {offsets = [2, 0], sizes = [1, 32], strides = [1, 1]} : vector<8x128xf32> to vector<1x32xf32>
    %39 = vector.extract_strided_slice %35 {offsets = [3, 0], sizes = [1, 32], strides = [1, 1]} : vector<8x128xf32> to vector<1x32xf32>
    %40 = vector.extract_strided_slice %35 {offsets = [4, 0], sizes = [1, 128], strides = [1, 1]} : vector<8x128xf32> to vector<1x128xf32>
    %41 = vector.extract_strided_slice %35 {offsets = [5, 0], sizes = [1, 32], strides = [1, 1]} : vector<8x128xf32> to vector<1x32xf32>
    %42 = vector.extract_strided_slice %35 {offsets = [6, 0], sizes = [1, 128], strides = [1, 1]} : vector<8x128xf32> to vector<1x128xf32>
    %43 = vector.extract_strided_slice %35 {offsets = [7, 0], sizes = [1, 32], strides = [1, 1]} : vector<8x128xf32> to vector<1x32xf32>
    %cst_20 = arith.constant dense<0.000000e+00> : vector<10xf32>
    %44 = vector.multi_reduction <add>, %30, %cst_20 [1] : vector<10x32xf32> to vector<10xf32>
    %45 = vector.shape_cast %44 : vector<10xf32> to vector<10x1xf32>
    %cst_21 = arith.constant 3.200000e+01 : f32
    %46 = vector.broadcast %cst_21 : f32 to vector<10x1xf32>
    %47 = arith.divf %45, %46 : vector<10x1xf32>
    %48 = vector.broadcast %47 : vector<10x1xf32> to vector<10x32xf32>
    %49 = arith.subf %30, %48 : vector<10x32xf32>
    %50 = arith.mulf %49, %49 : vector<10x32xf32>
    %cst_22 = arith.constant dense<0.000000e+00> : vector<10xf32>
    %51 = vector.multi_reduction <add>, %50, %cst_22 [1] : vector<10x32xf32> to vector<10xf32>
    %52 = vector.shape_cast %51 : vector<10xf32> to vector<10x1xf32>
    %cst_23 = arith.constant 3.200000e+01 : f32
    %53 = vector.broadcast %cst_23 : f32 to vector<10x1xf32>
    %54 = arith.divf %52, %53 : vector<10x1xf32>
    %55 = vector.broadcast %47 : vector<10x1xf32> to vector<10x32xf32>
    %56 = arith.subf %30, %55 : vector<10x32xf32>
    %cst_24 = arith.constant 9.99999974E-6 : f32
    %57 = vector.broadcast %cst_24 : f32 to vector<10x1xf32>
    %58 = arith.addf %54, %57 : vector<10x1xf32>
    %59 = math.rsqrt %58 : vector<10x1xf32>
    %60 = vector.broadcast %59 : vector<10x1xf32> to vector<10x32xf32>
    %61 = arith.mulf %56, %60 : vector<10x32xf32>
    %62 = vector.broadcast %36 : vector<1x32xf32> to vector<10x32xf32>
    %63 = arith.mulf %61, %62 : vector<10x32xf32>
    %64 = vector.broadcast %37 : vector<1x32xf32> to vector<10x32xf32>
    %65 = arith.addf %63, %64 : vector<10x32xf32>
    %66 = vector.extract_strided_slice %34 {offsets = [0, 0], sizes = [32, 128], strides = [1, 1]} : vector<96x128xf32> to vector<32x128xf32>
    %cst_25 = arith.constant dense<0.000000e+00> : vector<10x128xf32>
    %67 = tpu.matmul %65, %66, %cst_25 {dimension_numbers = #tpu.dot_dimension_numbers<[1], [0], [0], [1], [0, 0, 1, 1], [], []>} : vector<10x32xf32>, vector<32x128xf32>, vector<10x128xf32> -> vector<10x128xf32>
    %68 = vector.broadcast %40 : vector<1x128xf32> to vector<10x128xf32>
    %69 = arith.addf %67, %68 : vector<10x128xf32>
    %70 = vector.extract_strided_slice %69 {offsets = [0, 0], sizes = [10, 32], strides = [1, 1]} : vector<10x128xf32> to vector<10x32xf32>
    %71 = vector.extract_strided_slice %69 {offsets = [0, 32], sizes = [10, 32], strides = [1, 1]} : vector<10x128xf32> to vector<10x32xf32>
    %72 = vector.extract_strided_slice %69 {offsets = [0, 64], sizes = [10, 32], strides = [1, 1]} : vector<10x128xf32> to vector<10x32xf32>
    %73 = tpu.concatenate %70, %70, %70, %70 in 0 : vector<10x32xf32>, vector<10x32xf32>, vector<10x32xf32>, vector<10x32xf32> -> vector<40x32xf32>
    %74 = arith.mulf %73, %31 : vector<40x32xf32>
    %75 = tpu.concatenate %71, %71, %71, %71 in 0 : vector<10x32xf32>, vector<10x32xf32>, vector<10x32xf32>, vector<10x32xf32> -> vector<40x32xf32>
    %76 = tpu.concatenate %72, %72, %72, %72 in 0 : vector<10x32xf32>, vector<10x32xf32>, vector<10x32xf32>, vector<10x32xf32> -> vector<40x32xf32>
    %77 = arith.mulf %76, %31 : vector<40x32xf32>
    %cst_26 = arith.constant dense<0.000000e+00> : vector<40x40xf32>
    %78 = tpu.matmul %74, %75, %cst_26 {dimension_numbers = #tpu.dot_dimension_numbers<[1], [1], [0], [0], [0, 0, 1, 0], [], []>} : vector<40x32xf32>, vector<40x32xf32>, vector<40x40xf32> -> vector<40x40xf32>
    %79 = arith.addf %78, %32 : vector<40x40xf32>
    %cst_27 = arith.constant dense<0xFF800000> : vector<40xf32>
    %80 = vector.multi_reduction <maximumf>, %79, %cst_27 [1] : vector<40x40xf32> to vector<40xf32>
    %81 = vector.shape_cast %80 : vector<40xf32> to vector<40x1xf32>
    %82 = vector.broadcast %81 : vector<40x1xf32> to vector<40x40xf32>
    %83 = arith.subf %79, %82 : vector<40x40xf32>
    %84 = math.exp %83 : vector<40x40xf32>
    %cst_28 = arith.constant dense<0.000000e+00> : vector<40xf32>
    %85 = vector.multi_reduction <add>, %84, %cst_28 [1] : vector<40x40xf32> to vector<40xf32>
    %86 = vector.shape_cast %85 : vector<40xf32> to vector<40x1xf32>
    %87 = tpu.reciprocal %86 {approx = true} : vector<40x1xf32> -> vector<40x1xf32>
    %88 = vector.broadcast %87 : vector<40x1xf32> to vector<40x40xf32>
    %89 = arith.mulf %84, %88 : vector<40x40xf32>
    %cst_29 = arith.constant dense<0.000000e+00> : vector<40x32xf32>
    %90 = tpu.matmul %89, %77, %cst_29 {dimension_numbers = #tpu.dot_dimension_numbers<[1], [0], [0], [1], [0, 0, 1, 1], [], []>} : vector<40x40xf32>, vector<40x32xf32>, vector<40x32xf32> -> vector<40x32xf32>
    %91 = vector.extract_strided_slice %90 {offsets = [0, 0], sizes = [10, 32], strides = [1, 1]} : vector<40x32xf32> to vector<10x32xf32>
    %92 = vector.extract_strided_slice %90 {offsets = [10, 0], sizes = [10, 32], strides = [1, 1]} : vector<40x32xf32> to vector<10x32xf32>
    %93 = arith.addf %91, %92 : vector<10x32xf32>
    %94 = vector.extract_strided_slice %90 {offsets = [20, 0], sizes = [10, 32], strides = [1, 1]} : vector<40x32xf32> to vector<10x32xf32>
    %95 = arith.addf %93, %94 : vector<10x32xf32>
    %96 = vector.extract_strided_slice %90 {offsets = [30, 0], sizes = [10, 32], strides = [1, 1]} : vector<40x32xf32> to vector<10x32xf32>
    %97 = arith.addf %95, %96 : vector<10x32xf32>
    %98 = vector.extract_strided_slice %34 {offsets = [32, 0], sizes = [32, 32], strides = [1, 1]} : vector<96x128xf32> to vector<32x32xf32>
    %cst_30 = arith.constant dense<0.000000e+00> : vector<10x32xf32>
    %99 = tpu.matmul %97, %98, %cst_30 {dimension_numbers = #tpu.dot_dimension_numbers<[1], [0], [0], [1], [0, 0, 1, 1], [], []>} : vector<10x32xf32>, vector<32x32xf32>, vector<10x32xf32> -> vector<10x32xf32>
    %100 = arith.addf %30, %99 : vector<10x32xf32>
    %101 = vector.broadcast %41 : vector<1x32xf32> to vector<10x32xf32>
    %102 = arith.addf %100, %101 : vector<10x32xf32>
    %cst_31 = arith.constant dense<0.000000e+00> : vector<10xf32>
    %103 = vector.multi_reduction <add>, %102, %cst_31 [1] : vector<10x32xf32> to vector<10xf32>
    %104 = vector.shape_cast %103 : vector<10xf32> to vector<10x1xf32>
    %cst_32 = arith.constant 3.200000e+01 : f32
    %105 = vector.broadcast %cst_32 : f32 to vector<10x1xf32>
    %106 = arith.divf %104, %105 : vector<10x1xf32>
    %107 = vector.broadcast %106 : vector<10x1xf32> to vector<10x32xf32>
    %108 = arith.subf %102, %107 : vector<10x32xf32>
    %109 = arith.mulf %108, %108 : vector<10x32xf32>
    %cst_33 = arith.constant dense<0.000000e+00> : vector<10xf32>
    %110 = vector.multi_reduction <add>, %109, %cst_33 [1] : vector<10x32xf32> to vector<10xf32>
    %111 = vector.shape_cast %110 : vector<10xf32> to vector<10x1xf32>
    %cst_34 = arith.constant 3.200000e+01 : f32
    %112 = vector.broadcast %cst_34 : f32 to vector<10x1xf32>
    %113 = arith.divf %111, %112 : vector<10x1xf32>
    %114 = vector.broadcast %106 : vector<10x1xf32> to vector<10x32xf32>
    %115 = arith.subf %102, %114 : vector<10x32xf32>
    %cst_35 = arith.constant 9.99999974E-6 : f32
    %116 = vector.broadcast %cst_35 : f32 to vector<10x1xf32>
    %117 = arith.addf %113, %116 : vector<10x1xf32>
    %118 = math.rsqrt %117 : vector<10x1xf32>
    %119 = vector.broadcast %118 : vector<10x1xf32> to vector<10x32xf32>
    %120 = arith.mulf %115, %119 : vector<10x32xf32>
    %121 = vector.broadcast %38 : vector<1x32xf32> to vector<10x32xf32>
    %122 = arith.mulf %120, %121 : vector<10x32xf32>
    %123 = vector.broadcast %39 : vector<1x32xf32> to vector<10x32xf32>
    %124 = arith.addf %122, %123 : vector<10x32xf32>
    %125 = vector.extract_strided_slice %34 {offsets = [64, 0], sizes = [32, 128], strides = [1, 1]} : vector<96x128xf32> to vector<32x128xf32>
    %cst_36 = arith.constant dense<0.000000e+00> : vector<10x128xf32>
    %126 = tpu.matmul %124, %125, %cst_36 {dimension_numbers = #tpu.dot_dimension_numbers<[1], [0], [0], [1], [0, 0, 1, 1], [], []>} : vector<10x32xf32>, vector<32x128xf32>, vector<10x128xf32> -> vector<10x128xf32>
    %127 = vector.broadcast %42 : vector<1x128xf32> to vector<10x128xf32>
    %128 = arith.addf %126, %127 : vector<10x128xf32>
    %129 = arith.mulf %128, %128 : vector<10x128xf32>
    %130 = arith.mulf %128, %129 : vector<10x128xf32>
    %cst_37 = arith.constant 4.471500e-02 : f32
    %131 = vector.broadcast %cst_37 : f32 to vector<10x128xf32>
    %132 = arith.mulf %131, %130 : vector<10x128xf32>
    %133 = arith.addf %128, %132 : vector<10x128xf32>
    %cst_38 = arith.constant 0.797884583 : f32
    %134 = vector.broadcast %cst_38 : f32 to vector<10x128xf32>
    %135 = arith.mulf %134, %133 : vector<10x128xf32>
    %136 = math.tanh %135 : vector<10x128xf32>
    %cst_39 = arith.constant 1.000000e+00 : f32
    %137 = vector.broadcast %cst_39 : f32 to vector<10x128xf32>
    %138 = arith.addf %137, %136 : vector<10x128xf32>
    %cst_40 = arith.constant 5.000000e-01 : f32
    %139 = vector.broadcast %cst_40 : f32 to vector<10x128xf32>
    %140 = arith.mulf %139, %138 : vector<10x128xf32>
    %141 = arith.mulf %128, %140 : vector<10x128xf32>
    %c0_41 = arith.constant 0 : index
    %c0_42 = arith.constant 0 : index
    %c0_43 = arith.constant 0 : index
    %142 = vector.load %arg5[%c0_41, %c0_42, %c0_43] : memref<2x128x32xf32, #tpu.memory_space<vmem>>, vector<1x128x32xf32>
    %143 = vector.shape_cast %142 : vector<1x128x32xf32> to vector<128x32xf32>
    %cst_44 = arith.constant dense<0.000000e+00> : vector<10x32xf32>
    %144 = tpu.matmul %141, %143, %cst_44 {dimension_numbers = #tpu.dot_dimension_numbers<[1], [0], [0], [1], [0, 0, 1, 1], [], []>} : vector<10x128xf32>, vector<128x32xf32>, vector<10x32xf32> -> vector<10x32xf32>
    %145 = vector.broadcast %43 : vector<1x32xf32> to vector<10x32xf32>
    %146 = arith.addf %144, %145 : vector<10x32xf32>
    %147 = arith.addf %102, %146 : vector<10x32xf32>
    %c1 = arith.constant 1 : index
    %c0_45 = arith.constant 0 : index
    %c0_46 = arith.constant 0 : index
    %148 = vector.load %arg4[%c1, %c0_45, %c0_46] : memref<2x96x128xf32, #tpu.memory_space<vmem>>, vector<1x96x128xf32>
    %149 = vector.shape_cast %148 : vector<1x96x128xf32> to vector<96x128xf32>
    %c144 = arith.constant 144 : index
    %c0_47 = arith.constant 0 : index
    %150 = vector.load %arg3[%c144, %c0_47] : memref<152x128xf32, #tpu.memory_space<vmem>>, vector<8x128xf32>
    %151 = vector.extract_strided_slice %150 {offsets = [0, 0], sizes = [1, 32], strides = [1, 1]} : vector<8x128xf32> to vector<1x32xf32>
    %152 = vector.extract_strided_slice %150 {offsets = [1, 0], sizes = [1, 32], strides = [1, 1]} : vector<8x128xf32> to vector<1x32xf32>
    %153 = vector.extract_strided_slice %150 {offsets = [2, 0], sizes = [1, 32], strides = [1, 1]} : vector<8x128xf32> to vector<1x32xf32>
    %154 = vector.extract_strided_slice %150 {offsets = [3, 0], sizes = [1, 32], strides = [1, 1]} : vector<8x128xf32> to vector<1x32xf32>
    %155 = vector.extract_strided_slice %150 {offsets = [4, 0], sizes = [1, 128], strides = [1, 1]} : vector<8x128xf32> to vector<1x128xf32>
    %156 = vector.extract_strided_slice %150 {offsets = [5, 0], sizes = [1, 32], strides = [1, 1]} : vector<8x128xf32> to vector<1x32xf32>
    %157 = vector.extract_strided_slice %150 {offsets = [6, 0], sizes = [1, 128], strides = [1, 1]} : vector<8x128xf32> to vector<1x128xf32>
    %158 = vector.extract_strided_slice %150 {offsets = [7, 0], sizes = [1, 32], strides = [1, 1]} : vector<8x128xf32> to vector<1x32xf32>
    %cst_48 = arith.constant dense<0.000000e+00> : vector<10xf32>
    %159 = vector.multi_reduction <add>, %147, %cst_48 [1] : vector<10x32xf32> to vector<10xf32>
    %160 = vector.shape_cast %159 : vector<10xf32> to vector<10x1xf32>
    %cst_49 = arith.constant 3.200000e+01 : f32
    %161 = vector.broadcast %cst_49 : f32 to vector<10x1xf32>
    %162 = arith.divf %160, %161 : vector<10x1xf32>
    %163 = vector.broadcast %162 : vector<10x1xf32> to vector<10x32xf32>
    %164 = arith.subf %147, %163 : vector<10x32xf32>
    %165 = arith.mulf %164, %164 : vector<10x32xf32>
    %cst_50 = arith.constant dense<0.000000e+00> : vector<10xf32>
    %166 = vector.multi_reduction <add>, %165, %cst_50 [1] : vector<10x32xf32> to vector<10xf32>
    %167 = vector.shape_cast %166 : vector<10xf32> to vector<10x1xf32>
    %cst_51 = arith.constant 3.200000e+01 : f32
    %168 = vector.broadcast %cst_51 : f32 to vector<10x1xf32>
    %169 = arith.divf %167, %168 : vector<10x1xf32>
    %170 = vector.broadcast %162 : vector<10x1xf32> to vector<10x32xf32>
    %171 = arith.subf %147, %170 : vector<10x32xf32>
    %cst_52 = arith.constant 9.99999974E-6 : f32
    %172 = vector.broadcast %cst_52 : f32 to vector<10x1xf32>
    %173 = arith.addf %169, %172 : vector<10x1xf32>
    %174 = math.rsqrt %173 : vector<10x1xf32>
    %175 = vector.broadcast %174 : vector<10x1xf32> to vector<10x32xf32>
    %176 = arith.mulf %171, %175 : vector<10x32xf32>
    %177 = vector.broadcast %151 : vector<1x32xf32> to vector<10x32xf32>
    %178 = arith.mulf %176, %177 : vector<10x32xf32>
    %179 = vector.broadcast %152 : vector<1x32xf32> to vector<10x32xf32>
    %180 = arith.addf %178, %179 : vector<10x32xf32>
    %181 = vector.extract_strided_slice %149 {offsets = [0, 0], sizes = [32, 128], strides = [1, 1]} : vector<96x128xf32> to vector<32x128xf32>
    %cst_53 = arith.constant dense<0.000000e+00> : vector<10x128xf32>
    %182 = tpu.matmul %180, %181, %cst_53 {dimension_numbers = #tpu.dot_dimension_numbers<[1], [0], [0], [1], [0, 0, 1, 1], [], []>} : vector<10x32xf32>, vector<32x128xf32>, vector<10x128xf32> -> vector<10x128xf32>
    %183 = vector.broadcast %155 : vector<1x128xf32> to vector<10x128xf32>
    %184 = arith.addf %182, %183 : vector<10x128xf32>
    %185 = vector.extract_strided_slice %184 {offsets = [0, 0], sizes = [10, 32], strides = [1, 1]} : vector<10x128xf32> to vector<10x32xf32>
    %186 = vector.extract_strided_slice %184 {offsets = [0, 32], sizes = [10, 32], strides = [1, 1]} : vector<10x128xf32> to vector<10x32xf32>
    %187 = vector.extract_strided_slice %184 {offsets = [0, 64], sizes = [10, 32], strides = [1, 1]} : vector<10x128xf32> to vector<10x32xf32>
    %188 = tpu.concatenate %185, %185, %185, %185 in 0 : vector<10x32xf32>, vector<10x32xf32>, vector<10x32xf32>, vector<10x32xf32> -> vector<40x32xf32>
    %189 = arith.mulf %188, %31 : vector<40x32xf32>
    %190 = tpu.concatenate %186, %186, %186, %186 in 0 : vector<10x32xf32>, vector<10x32xf32>, vector<10x32xf32>, vector<10x32xf32> -> vector<40x32xf32>
    %191 = tpu.concatenate %187, %187, %187, %187 in 0 : vector<10x32xf32>, vector<10x32xf32>, vector<10x32xf32>, vector<10x32xf32> -> vector<40x32xf32>
    %192 = arith.mulf %191, %31 : vector<40x32xf32>
    %cst_54 = arith.constant dense<0.000000e+00> : vector<40x40xf32>
    %193 = tpu.matmul %189, %190, %cst_54 {dimension_numbers = #tpu.dot_dimension_numbers<[1], [1], [0], [0], [0, 0, 1, 0], [], []>} : vector<40x32xf32>, vector<40x32xf32>, vector<40x40xf32> -> vector<40x40xf32>
    %194 = arith.addf %193, %32 : vector<40x40xf32>
    %cst_55 = arith.constant dense<0xFF800000> : vector<40xf32>
    %195 = vector.multi_reduction <maximumf>, %194, %cst_55 [1] : vector<40x40xf32> to vector<40xf32>
    %196 = vector.shape_cast %195 : vector<40xf32> to vector<40x1xf32>
    %197 = vector.broadcast %196 : vector<40x1xf32> to vector<40x40xf32>
    %198 = arith.subf %194, %197 : vector<40x40xf32>
    %199 = math.exp %198 : vector<40x40xf32>
    %cst_56 = arith.constant dense<0.000000e+00> : vector<40xf32>
    %200 = vector.multi_reduction <add>, %199, %cst_56 [1] : vector<40x40xf32> to vector<40xf32>
    %201 = vector.shape_cast %200 : vector<40xf32> to vector<40x1xf32>
    %202 = tpu.reciprocal %201 {approx = true} : vector<40x1xf32> -> vector<40x1xf32>
    %203 = vector.broadcast %202 : vector<40x1xf32> to vector<40x40xf32>
    %204 = arith.mulf %199, %203 : vector<40x40xf32>
    %cst_57 = arith.constant dense<0.000000e+00> : vector<40x32xf32>
    %205 = tpu.matmul %204, %192, %cst_57 {dimension_numbers = #tpu.dot_dimension_numbers<[1], [0], [0], [1], [0, 0, 1, 1], [], []>} : vector<40x40xf32>, vector<40x32xf32>, vector<40x32xf32> -> vector<40x32xf32>
    %206 = vector.extract_strided_slice %205 {offsets = [0, 0], sizes = [10, 32], strides = [1, 1]} : vector<40x32xf32> to vector<10x32xf32>
    %207 = vector.extract_strided_slice %205 {offsets = [10, 0], sizes = [10, 32], strides = [1, 1]} : vector<40x32xf32> to vector<10x32xf32>
    %208 = arith.addf %206, %207 : vector<10x32xf32>
    %209 = vector.extract_strided_slice %205 {offsets = [20, 0], sizes = [10, 32], strides = [1, 1]} : vector<40x32xf32> to vector<10x32xf32>
    %210 = arith.addf %208, %209 : vector<10x32xf32>
    %211 = vector.extract_strided_slice %205 {offsets = [30, 0], sizes = [10, 32], strides = [1, 1]} : vector<40x32xf32> to vector<10x32xf32>
    %212 = arith.addf %210, %211 : vector<10x32xf32>
    %213 = vector.extract_strided_slice %149 {offsets = [32, 0], sizes = [32, 32], strides = [1, 1]} : vector<96x128xf32> to vector<32x32xf32>
    %cst_58 = arith.constant dense<0.000000e+00> : vector<10x32xf32>
    %214 = tpu.matmul %212, %213, %cst_58 {dimension_numbers = #tpu.dot_dimension_numbers<[1], [0], [0], [1], [0, 0, 1, 1], [], []>} : vector<10x32xf32>, vector<32x32xf32>, vector<10x32xf32> -> vector<10x32xf32>
    %215 = arith.addf %147, %214 : vector<10x32xf32>
    %216 = vector.broadcast %156 : vector<1x32xf32> to vector<10x32xf32>
    %217 = arith.addf %215, %216 : vector<10x32xf32>
    %cst_59 = arith.constant dense<0.000000e+00> : vector<10xf32>
    %218 = vector.multi_reduction <add>, %217, %cst_59 [1] : vector<10x32xf32> to vector<10xf32>
    %219 = vector.shape_cast %218 : vector<10xf32> to vector<10x1xf32>
    %cst_60 = arith.constant 3.200000e+01 : f32
    %220 = vector.broadcast %cst_60 : f32 to vector<10x1xf32>
    %221 = arith.divf %219, %220 : vector<10x1xf32>
    %222 = vector.broadcast %221 : vector<10x1xf32> to vector<10x32xf32>
    %223 = arith.subf %217, %222 : vector<10x32xf32>
    %224 = arith.mulf %223, %223 : vector<10x32xf32>
    %cst_61 = arith.constant dense<0.000000e+00> : vector<10xf32>
    %225 = vector.multi_reduction <add>, %224, %cst_61 [1] : vector<10x32xf32> to vector<10xf32>
    %226 = vector.shape_cast %225 : vector<10xf32> to vector<10x1xf32>
    %cst_62 = arith.constant 3.200000e+01 : f32
    %227 = vector.broadcast %cst_62 : f32 to vector<10x1xf32>
    %228 = arith.divf %226, %227 : vector<10x1xf32>
    %229 = vector.broadcast %221 : vector<10x1xf32> to vector<10x32xf32>
    %230 = arith.subf %217, %229 : vector<10x32xf32>
    %cst_63 = arith.constant 9.99999974E-6 : f32
    %231 = vector.broadcast %cst_63 : f32 to vector<10x1xf32>
    %232 = arith.addf %228, %231 : vector<10x1xf32>
    %233 = math.rsqrt %232 : vector<10x1xf32>
    %234 = vector.broadcast %233 : vector<10x1xf32> to vector<10x32xf32>
    %235 = arith.mulf %230, %234 : vector<10x32xf32>
    %236 = vector.broadcast %153 : vector<1x32xf32> to vector<10x32xf32>
    %237 = arith.mulf %235, %236 : vector<10x32xf32>
    %238 = vector.broadcast %154 : vector<1x32xf32> to vector<10x32xf32>
    %239 = arith.addf %237, %238 : vector<10x32xf32>
    %240 = vector.extract_strided_slice %149 {offsets = [64, 0], sizes = [32, 128], strides = [1, 1]} : vector<96x128xf32> to vector<32x128xf32>
    %cst_64 = arith.constant dense<0.000000e+00> : vector<10x128xf32>
    %241 = tpu.matmul %239, %240, %cst_64 {dimension_numbers = #tpu.dot_dimension_numbers<[1], [0], [0], [1], [0, 0, 1, 1], [], []>} : vector<10x32xf32>, vector<32x128xf32>, vector<10x128xf32> -> vector<10x128xf32>
    %242 = vector.broadcast %157 : vector<1x128xf32> to vector<10x128xf32>
    %243 = arith.addf %241, %242 : vector<10x128xf32>
    %244 = arith.mulf %243, %243 : vector<10x128xf32>
    %245 = arith.mulf %243, %244 : vector<10x128xf32>
    %cst_65 = arith.constant 4.471500e-02 : f32
    %246 = vector.broadcast %cst_65 : f32 to vector<10x128xf32>
    %247 = arith.mulf %246, %245 : vector<10x128xf32>
    %248 = arith.addf %243, %247 : vector<10x128xf32>
    %cst_66 = arith.constant 0.797884583 : f32
    %249 = vector.broadcast %cst_66 : f32 to vector<10x128xf32>
    %250 = arith.mulf %249, %248 : vector<10x128xf32>
    %251 = math.tanh %250 : vector<10x128xf32>
    %cst_67 = arith.constant 1.000000e+00 : f32
    %252 = vector.broadcast %cst_67 : f32 to vector<10x128xf32>
    %253 = arith.addf %252, %251 : vector<10x128xf32>
    %cst_68 = arith.constant 5.000000e-01 : f32
    %254 = vector.broadcast %cst_68 : f32 to vector<10x128xf32>
    %255 = arith.mulf %254, %253 : vector<10x128xf32>
    %256 = arith.mulf %243, %255 : vector<10x128xf32>
    %c1_69 = arith.constant 1 : index
    %c0_70 = arith.constant 0 : index
    %c0_71 = arith.constant 0 : index
    %257 = vector.load %arg5[%c1_69, %c0_70, %c0_71] : memref<2x128x32xf32, #tpu.memory_space<vmem>>, vector<1x128x32xf32>
    %258 = vector.shape_cast %257 : vector<1x128x32xf32> to vector<128x32xf32>
    %cst_72 = arith.constant dense<0.000000e+00> : vector<10x32xf32>
    %259 = tpu.matmul %256, %258, %cst_72 {dimension_numbers = #tpu.dot_dimension_numbers<[1], [0], [0], [1], [0, 0, 1, 1], [], []>} : vector<10x128xf32>, vector<128x32xf32>, vector<10x32xf32> -> vector<10x32xf32>
    %260 = vector.broadcast %158 : vector<1x32xf32> to vector<10x32xf32>
    %261 = arith.addf %259, %260 : vector<10x32xf32>
    %262 = arith.addf %217, %261 : vector<10x32xf32>
    %263 = vector.extract_strided_slice %262 {offsets = [0, 0], sizes = [2, 32], strides = [1, 1]} : vector<10x32xf32> to vector<2x32xf32>
    %cst_73 = arith.constant dense<0.000000e+00> : vector<2xf32>
    %264 = vector.multi_reduction <add>, %263, %cst_73 [1] : vector<2x32xf32> to vector<2xf32>
    %265 = vector.shape_cast %264 : vector<2xf32> to vector<2x1xf32>
    %cst_74 = arith.constant 3.200000e+01 : f32
    %266 = vector.broadcast %cst_74 : f32 to vector<2x1xf32>
    %267 = arith.divf %265, %266 : vector<2x1xf32>
    %268 = vector.broadcast %267 : vector<2x1xf32> to vector<2x32xf32>
    %269 = arith.subf %263, %268 : vector<2x32xf32>
    %270 = arith.mulf %269, %269 : vector<2x32xf32>
    %cst_75 = arith.constant dense<0.000000e+00> : vector<2xf32>
    %271 = vector.multi_reduction <add>, %270, %cst_75 [1] : vector<2x32xf32> to vector<2xf32>
    %272 = vector.shape_cast %271 : vector<2xf32> to vector<2x1xf32>
    %cst_76 = arith.constant 3.200000e+01 : f32
    %273 = vector.broadcast %cst_76 : f32 to vector<2x1xf32>
    %274 = arith.divf %272, %273 : vector<2x1xf32>
    %275 = vector.broadcast %267 : vector<2x1xf32> to vector<2x32xf32>
    %276 = arith.subf %263, %275 : vector<2x32xf32>
    %cst_77 = arith.constant 9.99999974E-6 : f32
    %277 = vector.broadcast %cst_77 : f32 to vector<2x1xf32>
    %278 = arith.addf %274, %277 : vector<2x1xf32>
    %279 = math.rsqrt %278 : vector<2x1xf32>
    %280 = vector.broadcast %279 : vector<2x1xf32> to vector<2x32xf32>
    %281 = arith.mulf %276, %280 : vector<2x32xf32>
    %282 = vector.broadcast %7 : vector<1x32xf32> to vector<2x32xf32>
    %283 = arith.mulf %281, %282 : vector<2x32xf32>
    %284 = vector.broadcast %8 : vector<1x32xf32> to vector<2x32xf32>
    %285 = arith.addf %283, %284 : vector<2x32xf32>
    %c104 = arith.constant 104 : index
    %c0_78 = arith.constant 0 : index
    %286 = vector.load %arg3[%c104, %c0_78] : memref<152x128xf32, #tpu.memory_space<vmem>>, vector<32x128xf32>
    %cst_79 = arith.constant dense<0.000000e+00> : vector<2x128xf32>
    %287 = tpu.matmul %285, %286, %cst_79 {dimension_numbers = #tpu.dot_dimension_numbers<[1], [0], [0], [1], [0, 0, 1, 1], [], []>} : vector<2x32xf32>, vector<32x128xf32>, vector<2x128xf32> -> vector<2x128xf32>
    %288 = vector.extract_strided_slice %287 {offsets = [0, 0], sizes = [2, 24], strides = [1, 1]} : vector<2x128xf32> to vector<2x24xf32>
    %c0_80 = arith.constant 0 : index
    %c0_81 = arith.constant 0 : index
    %289 = vector.load %arg6[%c0_80, %c0_81] : memref<2x24xf32, #tpu.memory_space<vmem>>, vector<2x24xf32>
    tpu.vector_store %arg6[%c0_80, %c0_81], %288 {strides = array<i32>} : memref<2x24xf32, #tpu.memory_space<vmem>>, vector<2x24xf32>,
    return
  }
  func.func @transform_0(%arg0: i32) -> (i32, i32) {
    %c0_i32 = arith.constant 0 : i32
    %c0_i32_0 = arith.constant 0 : i32
    %c0_i32_1 = arith.constant 0 : i32
    return %c0_i32, %c0_i32_0 : i32, i32
  }
  func.func @transform_1(%arg0: i32) -> (i32, i32) {
    %c0_i32 = arith.constant 0 : i32
    %c0_i32_0 = arith.constant 0 : i32
    %c0_i32_1 = arith.constant 0 : i32
    return %c0_i32, %c0_i32_0 : i32, i32
  }
  func.func @transform_2(%arg0: i32) -> (i32, i32) {
    %c0_i32 = arith.constant 0 : i32
    %c0_i32_0 = arith.constant 0 : i32
    %c0_i32_1 = arith.constant 0 : i32
    return %c0_i32, %c0_i32_0 : i32, i32
  }
  func.func @transform_3(%arg0: i32) -> (i32, i32, i32) {
    %c0_i32 = arith.constant 0 : i32
    %c0_i32_0 = arith.constant 0 : i32
    %c0_i32_1 = arith.constant 0 : i32
    %c0_i32_2 = arith.constant 0 : i32
    return %c0_i32, %c0_i32_0, %c0_i32_1 : i32, i32, i32
  }
  func.func @transform_4(%arg0: i32) -> (i32, i32, i32) {
    %c0_i32 = arith.constant 0 : i32
    %c0_i32_0 = arith.constant 0 : i32
    %c0_i32_1 = arith.constant 0 : i32
    %c0_i32_2 = arith.constant 0 : i32
    return %c0_i32, %c0_i32_0, %c0_i32_1 : i32, i32, i32
  }
  func.func @transform_5(%arg0: i32) -> (i32, i32) {
    %c0_i32 = arith.constant 0 : i32
    %c0_i32_0 = arith.constant 0 : i32
    %c0_i32_1 = arith.constant 0 : i32
    return %c0_i32, %c0_i32_0 : i32, i32
  }
}

</mosaic_0001>

<llo_original>
// kernel: clip_image_embed.2
$region0: #{clip_image_embed.2}
  #allocation0 [shape = 'u32[]', space=smem, size = 0x4, offset = 0x4, fixed_abs, tag = 'smem constant byte address 0x4 - core index']
  #allocation1 [shape = 'u32[144,128]{1,0:T(1,128)}', space=vmem, size = 0x12000, scoped, tag = 'internal scratch']
  #allocation2 [shape = 'u32[2048]{0}', space=vmem, size = 0x2000, scoped, tag = 'scoped memory for clip_image_embed.2']
  #allocation3 [shape = 'u32[2048]{0}', space=vmem, size = 0x2000, scoped, tag = 'scoped memory for clip_image_embed.2']
  #allocation4 [shape = 'u32[2048]{0}', space=vmem, size = 0x2000, scoped, tag = 'scoped memory for clip_image_embed.2']
  #allocation5 [shape = 'u32[2048]{0}', space=vmem, size = 0x2000, scoped, tag = 'scoped memory for clip_image_embed.2']
  #allocation6 [shape = 'u32[2048]{0}', space=vmem, size = 0x2000, scoped, tag = 'scoped memory for clip_image_embed.2']
  %s0 = inlined_call_operand.vmem [shape: f32[192,32], index: 0, kind: input, shape index: {}]
  %s1 = inlined_call_operand.vmem [shape: f32[152,128], index: 1, kind: input, shape index: {}]
  %s2 = inlined_call_operand.vmem [shape: f32[2,96,128], index: 2, kind: input, shape index: {}]
  %s3 = inlined_call_operand.vmem [shape: f32[2,128,32], index: 3, kind: input, shape index: {}]
  %s4 = inlined_call_operand.vmem [shape: f32[8,192], index: 4, kind: input, shape index: {}]
  %s5 = inlined_call_operand.<no memory space> [shape: f32[], index: 5, kind: input, shape index: {}]
  %s6 = inlined_call_operand.hbm [shape: f32[2,24], index: 6, kind: output, shape index: {}]
  %s7 = sld [smem:[#allocation0]]
  $region30: #{clip_image_embed.2} parent=0
    _
  %s9 = ssub.s32 1, %s7
  %s10 = scalar_select 0, %s9, %s7
  %v11 = vstv %s5
  $region1: #{clip_image_embed.2} parent=0
    #allocation7 [shape = 'u8[1024]{0}', space=vmem, size = 0x400, scoped, tag = 'output window, operand 0, single buffered']
    #allocation8 [shape = 's32[1]{0}', space=sflag, size = 0x4, scoped, tag = 'scoped memory for clip_image_embed.2']
    #allocation9 [shape = 'u8[16384]{0}', space=vmem, size = 0x4000, dematerialized = true, scoped, tag = 'FusionAdapter Buffer %fusion.1 = f32[10,192]{1,0:T(8,128)} fusion(%param_4.1, %param_5), kind=kLoop, calls=%fused_computation.2.clone, metadata={op_name="jit(clip_image_embed)/concatenate" stack_frame_id=10}']
    %12 = vsyncpa [#allocation8], 0
    // Predicated region
    $region2: #{clip_image_embed.2} parent=1 // pred_check
      _
    $region3: #{clip_image_embed.2} parent=1 // pred_check_branch
      %14 = sbr.rel (0) target = $region5
    $region4: #{clip_image_embed.2} parent=1 // pred_region
      %s16 = ssub.s32 1, 0
      %s17 = smul.u32 128, %s16
      %s18 = smul.u32 %s17, 2
      %p19 = scmp.lt.s32.totalorder 0, 0
      %s20 = scalar_select %p19, 0, 0
      %s21 = smul.addr %s20, 2
      %s22 = smul.addr %s21, 8
      %s23 = scalar_lea.vmem %s4, %s22
      %s25 = ssub.s32 1, 0
      %s26 = smul.u32 128, %s25
      %s27 = smul.u32 %s26, 2
    $region5: #{clip_image_embed.2} parent=1 // pred_fallthru
      _
    // Predicated region
    $region6: #{clip_image_embed.2} parent=1 // pred_check
      _
    $region7: #{clip_image_embed.2} parent=1 // pred_check_branch
      %29 = sbr.rel (0) target = $region9
    $region8: #{clip_image_embed.2} parent=1 // pred_region
      _
    $region9: #{clip_image_embed.2} parent=1 // pred_fallthru
      _
    // Predicated region
    $region10: #{clip_image_embed.2} parent=1 // pred_check
      _
    $region11: #{clip_image_embed.2} parent=1 // pred_check_branch
      %31 = sbr.rel (0) target = $region13
    $region12: #{clip_image_embed.2} parent=1 // pred_region
      _
    $region13: #{clip_image_embed.2} parent=1 // pred_fallthru
      _
    // Predicated region
    $region14: #{clip_image_embed.2} parent=1 // pred_check
      _
    $region15: #{clip_image_embed.2} parent=1 // pred_check_branch
      %33 = sbr.rel (0) target = $region17
    $region16: #{clip_image_embed.2} parent=1 // pred_region
      _
    $region17: #{clip_image_embed.2} parent=1 // pred_fallthru
      _
    // Predicated region
    $region18: #{clip_image_embed.2} parent=1 // pred_check
      _
    $region19: #{clip_image_embed.2} parent=1 // pred_check_branch
      %35 = sbr.rel (0) target = $region21
    $region20: #{clip_image_embed.2} parent=1 // pred_region
      _
    $region21: #{clip_image_embed.2} parent=1 // pred_fallthru
      _
    %s37 = ssub.s32 1, 0
    %s38 = smul.u32 128, %s37
    %s39 = smul.u32 %s38, 2
    %p40 = scmp.lt.s32.totalorder 0, 0
    %s41 = scalar_select %p40, 0, 0
    %s42 = smul.addr %s41, 2
    %s43 = smul.addr %s42, 8
    %s44 = scalar_lea.vmem %s4, %s43
    %s46 = ssub.s32 1, 0
    %s47 = smul.u32 128, %s46
    %s48 = smul.u32 %s47, 2
    %p49 = scmp.lt.s32.totalorder 0, 0
    %s50 = scalar_select %p49, 0, 0
    %s51 = smul.addr %s50, 2
    %s52 = smul.addr %s51, 8
    %s53 = scalar_lea.vmem %s4, %s52
    %s55 = ssub.s32 1, 0
    %s56 = smul.u32 128, %s55
    %s57 = smul.u32 %s56, 2
    %s58 = ssub.s32 0, 0
    %p59 = scmp.lt.s32.totalorder %s58, 0
    %s60 = scalar_select %p59, 0, 255
    %v61 = vld [vmem:[%s53] sm:%s60]
    %v62 = vlaneseq
    %v63 = vand.u32 %v62, 127
    %vm65 = vcmp.lt.s32.totalorder %v63, 192
    %v66 = vsel %vm65, %v61, %v11
    %vm67 = vcmask 1045504
    %v68 = vsel %vm67, %v66, %v11
    %v69 = vrot.slane %v68, 6
    %71 = vst [vmem:[#allocation9] sm:$0xff] %v69
    %s72 = scalar_lea.vmem %s53, 8
    %s73 = ssub.s32 0, 0
    %p74 = scmp.lt.s32.totalorder %s73, 0
    %s75 = scalar_select %p74, 0, 255
    %v76 = vld [vmem:[%s72] sm:%s75]
    %s77 = scalar_lea.vmem %s53, 8
    %v78 = vlaneseq
    %v79 = vand.u32 %v78, 127
    %v80 = vadd.s32 %v79, 128
    %vm81 = vcmp.lt.s32.totalorder %v80, 192
    %v82 = vsel %vm81, %v76, %v11
    %vm83 = vcmask 1045504
    %v84 = vsel %vm83, %v82, %v11
    %v85 = vrot.slane %v84, 6
    %s86 = scalar_lea.vmem [#allocation9], 8
    %88 = vst [vmem:[%s86] sm:$0xff] %v85
    %vm89 = vcmask 1045504
    %v90 = vsel %vm89, %v11, %v66
    %v91 = vrot.slane %v90, 6
    %s92 = scalar_lea.vmem [#allocation9], 16
    %94 = vst [vmem:[%s92] sm:$0xff] %v91
    %vm95 = vcmask 1045504
    %v96 = vsel %vm95, %v11, %v82
    %v97 = vrot.slane %v96, 6
    %s98 = scalar_lea.vmem [#allocation9], 24
    %100 = vst [vmem:[%s98] sm:$0xff] %v97
    %v101 = vld [vmem:[#allocation9] sm:$0xff]
    %v102 = vld [vmem:[#allocation9 + $0x8] sm:$0xff]
    %v103 = vld [vmem:[#allocation9 + $0x10] sm:$0x3]
    %v104 = vld [vmem:[#allocation9 + $0x18] sm:$0x3]
    %v105 = vld [vmem:[%s0] sm:$0xff]
    %v106 = vld [vmem:[%s0 + $0x8] sm:$0xff]
    %v107 = vld [vmem:[%s0 + $0x10] sm:$0xff]
    %v108 = vld [vmem:[%s0 + $0x18] sm:$0xff]
    %v109 = vld [vmem:[%s0 + $0x20] sm:$0xff]
    %v110 = vld [vmem:[%s0 + $0x28] sm:$0xff]
    %v111 = vld [vmem:[%s0 + $0x30] sm:$0xff]
    %v112 = vld [vmem:[%s0 + $0x38] sm:$0xff]
    %v113 = vld [vmem:[%s0 + $0x40] sm:$0xff]
    %v114 = vld [vmem:[%s0 + $0x48] sm:$0xff]
    %v115 = vld [vmem:[%s0 + $0x50] sm:$0xff]
    %v116 = vld [vmem:[%s0 + $0x58] sm:$0xff]
    %v117 = vld [vmem:[%s0 + $0x60] sm:$0xff]
    %v118 = vld [vmem:[%s0 + $0x68] sm:$0xff]
    %v119 = vld [vmem:[%s0 + $0x70] sm:$0xff]
    %v120 = vld [vmem:[%s0 + $0x78] sm:$0xff]
    %v121 = vld [vmem:[%s0 + $0x80] sm:$0xff]
    %v122 = vld [vmem:[%s0 + $0x88] sm:$0xff]
    %v123 = vld [vmem:[%s0 + $0x90] sm:$0xff]
    %v124 = vld [vmem:[%s0 + $0x98] sm:$0xff]
    %v125 = vld [vmem:[%s0 + $0xa0] sm:$0xff]
    %v126 = vld [vmem:[%s0 + $0xa8] sm:$0xff]
    %v127 = vld [vmem:[%s0 + $0xb0] sm:$0xff]
    %v128 = vld [vmem:[%s0 + $0xb8] sm:$0xff]
    %v129 = vld [vmem:[%s1] sm:$0xff]
    %v130 = vld [vmem:[%s1 + $0x8] sm:$0x3]
    %vm131 = vcmask 523264
    %v133 = vsel %vm131, %v102, 0
    %v136 = vsel %vm131, %v104, 0
    %138 = vmatprep.subr.mxu0 0.0
    %139 = vmatpush1.msra.mxu0 %v105
    %140 = vmatprep.subr.mxu0 0.0
    %141 = vmatpush1.msra.mxu0 %v106
    %142 = vmatprep.subr.mxu0 0.0
    %143 = vmatpush1.msra.mxu0 %v107
    %144 = vmatprep.subr.mxu0 0.0
    %145 = vmatpush1.msra.mxu0 %v108
    %146 = vmatprep.subr.mxu0 0.0
    %147 = vmatpush1.msra.mxu0 %v109
    %148 = vmatprep.subr.mxu0 0.0
    %149 = vmatpush1.msra.mxu0 %v110
    %150 = vmatprep.subr.mxu0 0.0
    %151 = vmatpush1.msra.mxu0 %v111
    %152 = vmatprep.subr.mxu0 0.0
    %153 = vmatpush1.msra.mxu0 %v112
    %154 = vmatprep.subr.mxu0 0.0
    %155 = vmatpush1.msra.mxu0 %v113
    %156 = vmatprep.subr.mxu0 0.0
    %157 = vmatpush1.msra.mxu0 %v114
    %158 = vmatprep.subr.mxu0 0.0
    %159 = vmatpush1.msra.mxu0 %v115
    %160 = vmatprep.subr.mxu0 0.0
    %161 = vmatpush1.msra.mxu0 %v116
    %162 = vmatprep.subr.mxu0 0.0
    %163 = vmatpush1.msra.mxu0 %v117
    %164 = vmatprep.subr.mxu0 0.0
    %165 = vmatpush1.msra.mxu0 %v118
    %166 = vmatprep.subr.mxu0 0.0
    %167 = vmatpush1.msra.mxu0 %v119
    %168 = vmatprep.subr.mxu0 0.0
    %169 = vmatpush1.msra.mxu0 %v120
    %170 = vmatprep.subr.mxu0 0.0
    %171 = vmatpush1.msra.mxu0 %v121
    %172 = vmatprep.subr.mxu0 0.0
    %173 = vmatpush1.msra.mxu0 %v122
    %174 = vmatprep.subr.mxu0 0.0
    %175 = vmatpush1.msra.mxu0 %v123
    %176 = vmatprep.subr.mxu0 0.0
    %177 = vmatpush1.msra.mxu0 %v124
    %178 = vmatprep.subr.mxu0 0.0
    %179 = vmatpush1.msra.mxu0 %v125
    %180 = vmatprep.subr.mxu0 0.0
    %181 = vmatpush1.msra.mxu0 %v126
    %182 = vmatprep.subr.mxu0 0.0
    %183 = vmatpush1.msra.mxu0 %v127
    %184 = vmatprep.subr.mxu0 0.0
    %185 = vmatpush1.msra.mxu0 %v128
    %186 = vmatprep.subr.mxu0 0.0
    %187 = vmatpush1.msra.mxu0 0.0
    %188 = vmatprep.subr.mxu0 0.0
    %189 = vmatpush1.msra.mxu0 0.0
    %190 = vmatprep.subr.mxu0 0.0
    %191 = vmatpush1.msra.mxu0 0.0
    %192 = vmatprep.subr.mxu0 0.0
    %193 = vmatpush1.msra.mxu0 0.0
    %194 = vmatprep.subr.mxu0 0.0
    %195 = vmatpush1.msra.mxu0 0.0
    %196 = vmatprep.subr.mxu0 0.0
    %197 = vmatpush1.msra.mxu0 0.0
    %198 = vmatprep.subr.mxu0 0.0
    %199 = vmatpush1.msra.mxu0 0.0
    %200 = vmatprep.subr.mxu0 0.0
    %201 = vmatpush1.msra.mxu0 0.0
    %202 = vmatprep.mubr.f32.mxu0 %v133
    %203 = vmatmul.mubr.f32.gmra.mrb[0].mxu0 %v101
    %v204 = vpop.f32.mrb[0].mxu0
    %v205 = vadd.f32 %v129, %v204
    %v206 = vpop.f32.mrb[0].mxu0
    %207 = vmatprep.mubr.f32.mxu0 %v136
    %208 = vmatmul.mubr.f32.gmra.mrb[0].mxu0 %v103
    %v209 = vpop.f32.mrb[0].mxu0
    %v210 = vadd.f32 %v130, %v209
    %v211 = vpop.f32.mrb[0].mxu0
    %212 = vdwg.mxu0
    %v213 = vld [vmem:[%s1 + $0x10] sm:$0x1]
    %v214 = vld [vmem:[%s1 + $0x11] sm:$0x1]
    %v215 = vld [vmem:[%s1 + $0x12] sm:$0x1]
    %v216 = vld [vmem:[%s1 + $0x13] sm:$0x1]
    %vm217 = vcmask 261120
    %v218 = vsel %vm217, %v205, 0.0
    %219 = vadd.xlane.f32.xlu0 %v218
    %v220 = vpop.xlane.xlu0 %219
    %vm221 = vcmask 254976
    %v222 = vsel %vm221, %v210, 0.0
    %223 = vadd.xlane.f32.xlu0 %v222
    %v224 = vpop.xlane.xlu0 %223
    %v225 = vrcp.pop 32.0
    %v226 = vmul.f32 %v220, %v225
    %v227 = vmul.f32 %v224, %v225
    %v228 = vsub.f32 %v205, %v226
    %v229 = vsub.f32 %v210, %v227
    %v230 = vmul.f32 %v228, %v228
    %v231 = vmul.f32 %v229, %v229
    %v232 = vsel %vm217, %v230, 0.0
    %233 = vadd.xlane.f32.xlu0 %v232
    %v234 = vpop.xlane.xlu0 %233
    %v235 = vsel %vm221, %v231, 0.0
    %236 = vadd.xlane.f32.xlu0 %v235
    %v237 = vpop.xlane.xlu0 %236
    %v238 = vmul.f32 %v234, %v225
    %v239 = vmul.f32 %v237, %v225
    %v240 = vadd.f32 %v238, 1e-05
    %v241 = vadd.f32 %v239, 1e-05
    %v242 = vrsqrt.pop %v240
    %v243 = vrsqrt.pop %v241
    %v244 = vmul.f32 %v228, %v242
    %v245 = vmul.f32 %v229, %v243
    %v246 = vlaneseq
    %v247 = vshrl.u32 %v246, 7
    %v248 = vsub.s32 0, %v247
    %v249 = vrot.slane %v213, %v248
    %v250 = vmul.f32 %v244, %v249
    %v251 = vmul.f32 %v245, %v249
    %v252 = vlaneseq
    %v253 = vshrl.u32 %v252, 7
    %v254 = vsub.s32 0, %v253
    %v255 = vrot.slane %v214, %v254
    %v256 = vadd.f32 %v250, %v255
    %v257 = vadd.f32 %v251, %v255
    %v258 = vld [vmem:[%s1 + $0x18] sm:$0xff]
    %v259 = vld [vmem:[%s1 + $0x20] sm:$0xff]
    %v260 = vld [vmem:[%s1 + $0x28] sm:$0xff]
    %v261 = vld [vmem:[%s1 + $0x30] sm:$0xff]
    %v262 = vld [vmem:[%s1 + $0x38] sm:$0xff]
    %v263 = vld [vmem:[%s1 + $0x40] sm:$0xff]
    %v264 = vld [vmem:[%s1 + $0x48] sm:$0xff]
    %v265 = vld [vmem:[%s1 + $0x50] sm:$0xff]
    %v266 = vld [vmem:[%s1 + $0x58] sm:$0xff]
    %v267 = vld [vmem:[%s1 + $0x60] sm:$0xff]
    %v268 = vld [vmem:[%s2] sm:$0xff]
    %v269 = vld [vmem:[%s2 + $0x8] sm:$0xff]
    %v270 = vld [vmem:[%s2 + $0x10] sm:$0xff]
    %v271 = vld [vmem:[%s2 + $0x18] sm:$0xff]
    %v272 = vld [vmem:[%s2 + $0x20] sm:$0xff]
    %v273 = vld [vmem:[%s2 + $0x28] sm:$0xff]
    %v274 = vld [vmem:[%s2 + $0x30] sm:$0xff]
    %v275 = vld [vmem:[%s2 + $0x38] sm:$0xff]
    %v276 = vld [vmem:[%s2 + $0x40] sm:$0xff]
    %v277 = vld [vmem:[%s2 + $0x48] sm:$0xff]
    %v278 = vld [vmem:[%s2 + $0x50] sm:$0xff]
    %v279 = vld [vmem:[%s2 + $0x58] sm:$0xff]
    %v280 = vld [vmem:[%s1 + $0x88] sm:$0xff]
    %v281 = vsel %vm217, %v256, 0.0
    %282 = vadd.xlane.f32.xlu0 %v281
    %v283 = vpop.xlane.xlu0 %282
    %v284 = vsel %vm221, %v257, 0.0
    %285 = vadd.xlane.f32.xlu0 %v284
    %v286 = vpop.xlane.xlu0 %285
    %v287 = vmul.f32 %v283, %v225
    %v288 = vmul.f32 %v286, %v225
    %v289 = vsub.f32 %v256, %v287
    %v290 = vsub.f32 %v257, %v288
    %v291 = vmul.f32 %v289, %v289
    %v292 = vmul.f32 %v290, %v290
    %v293 = vsel %vm217, %v291, 0.0
    %294 = vadd.xlane.f32.xlu0 %v293
    %v295 = vpop.xlane.xlu0 %294
    %v296 = vsel %vm221, %v292, 0.0
    %297 = vadd.xlane.f32.xlu0 %v296
    %v298 = vpop.xlane.xlu0 %297
    %v299 = vmul.f32 %v295, %v225
    %v300 = vmul.f32 %v298, %v225
    %v301 = vadd.f32 %v299, 1e-05
    %v302 = vadd.f32 %v300, 1e-05
    %v303 = vrsqrt.pop %v301
    %v304 = vrsqrt.pop %v302
    %v305 = vmul.f32 %v289, %v303
    %v306 = vmul.f32 %v290, %v304
    %v307 = vlaneseq
    %v308 = vshrl.u32 %v307, 7
    %v309 = vsub.s32 0, %v308
    %v310 = vrot.slane %v280, %v309
    %v311 = vmul.f32 %v305, %v310
    %v312 = vmul.f32 %v306, %v310
    %v313 = vlaneseq
    %v314 = vshrl.u32 %v313, 7
    %v315 = vsub.s32 1, %v314
    %v316 = vrot.slane %v280, %v315
    %v317 = vadd.f32 %v311, %v316
    %v318 = vadd.f32 %v312, %v316
    %v319 = vlaneseq
    %v320 = vshrl.u32 %v319, 7
    %v321 = vsub.s32 4, %v320
    %v322 = vrot.slane %v280, %v321
    %v324 = vsel %vm217, %v317, 0
    %v327 = vsel %vm217, %v318, 0
    %329 = vmatprep.subr.mxu0 0.0
    %330 = vmatpush1.msra.mxu0 %v268
    %331 = vmatprep.subr.mxu0 0.0
    %332 = vmatpush1.msra.mxu0 %v269
    %333 = vmatprep.subr.mxu0 0.0
    %334 = vmatpush1.msra.mxu0 %v270
    %335 = vmatprep.subr.mxu0 0.0
    %336 = vmatpush1.msra.mxu0 %v271
    %337 = vmatprep.subr.mxu0 0.0
    %338 = vmatpush1.msra.mxu0 0.0
    %339 = vmatprep.subr.mxu0 0.0
    %340 = vmatpush1.msra.mxu0 0.0
    %341 = vmatprep.subr.mxu0 0.0
    %342 = vmatpush1.msra.mxu0 0.0
    %343 = vmatprep.subr.mxu0 0.0
    %344 = vmatpush1.msra.mxu0 0.0
    %345 = vmatprep.subr.mxu0 0.0
    %346 = vmatpush1.msra.mxu0 0.0
    %347 = vmatprep.subr.mxu0 0.0
    %348 = vmatpush1.msra.mxu0 0.0
    %349 = vmatprep.subr.mxu0 0.0
    %350 = vmatpush1.msra.mxu0 0.0
    %351 = vmatprep.subr.mxu0 0.0
    %352 = vmatpush1.msra.mxu0 0.0
    %353 = vmatprep.subr.mxu0 0.0
    %354 = vmatpush1.msra.mxu0 0.0
    %355 = vmatprep.subr.mxu0 0.0
    %356 = vmatpush1.msra.mxu0 0.0
    %357 = vmatprep.subr.mxu0 0.0
    %358 = vmatpush1.msra.mxu0 0.0
    %359 = vmatprep.subr.mxu0 0.0
    %360 = vmatpush1.msra.mxu0 0.0
    %361 = vmatprep.subr.mxu0 0.0
    %362 = vmatpush1.msra.mxu0 0.0
    %363 = vmatprep.subr.mxu0 0.0
    %364 = vmatpush1.msra.mxu0 0.0
    %365 = vmatprep.subr.mxu0 0.0
    %366 = vmatpush1.msra.mxu0 0.0
    %367 = vmatprep.subr.mxu0 0.0
    %368 = vmatpush1.msra.mxu0 0.0
    %369 = vmatprep.subr.mxu0 0.0
    %370 = vmatpush1.msra.mxu0 0.0
    %371 = vmatprep.subr.mxu0 0.0
    %372 = vmatpush1.msra.mxu0 0.0
    %373 = vmatprep.subr.mxu0 0.0
    %374 = vmatpush1.msra.mxu0 0.0
    %375 = vmatprep.subr.mxu0 0.0
    %376 = vmatpush1.msra.mxu0 0.0
    %377 = vmatprep.subr.mxu0 0.0
    %378 = vmatpush1.msra.mxu0 0.0
    %379 = vmatprep.subr.mxu0 0.0
    %380 = vmatpush1.msra.mxu0 0.0
    %381 = vmatprep.subr.mxu0 0.0
    %382 = vmatpush1.msra.mxu0 0.0
    %383 = vmatprep.subr.mxu0 0.0
    %384 = vmatpush1.msra.mxu0 0.0
    %385 = vmatprep.subr.mxu0 0.0
    %386 = vmatpush1.msra.mxu0 0.0
    %387 = vmatprep.subr.mxu0 0.0
    %388 = vmatpush1.msra.mxu0 0.0
    %389 = vmatprep.subr.mxu0 0.0
    %390 = vmatpush1.msra.mxu0 0.0
    %391 = vmatprep.subr.mxu0 0.0
    %392 = vmatpush1.msra.mxu0 0.0
    %393 = vmatprep.mubr.f32.mxu0 0.0
    %394 = vmatmul.mubr.f32.gmra.mrb[0].mxu0 %v324
    %v395 = vpop.f32.mrb[0].mxu0
    %v396 = vadd.f32 %v322, %v395
    %v397 = vpop.f32.mrb[0].mxu0
    %398 = vmatprep.mubr.f32.mxu0 0.0
    %399 = vmatmul.mubr.f32.gmra.mrb[0].mxu0 %v327
    %v400 = vpop.f32.mrb[0].mxu0
    %v401 = vadd.f32 %v322, %v400
    %v402 = vpop.f32.mrb[0].mxu0
    %403 = vdwg.mxu0
    %vm406 = vcmask 1041408
    %v407 = vrot.slane %v396, 6
    %v408 = vrot.slane %v401, 6
    %v409 = vsel %vm406, %v407, %v408
    %vm412 = vcmask 1043456
    %v413 = vrot.slane %v396, 4
    %v414 = vrot.slane %v401, 4
    %v415 = vsel %vm412, %v413, %v414
    %vm418 = vcmask 1045504
    %v419 = vrot.slane %v396, 2
    %v420 = vrot.slane %v401, 2
    %v421 = vsel %vm418, %v419, %v420
    %v424 = vsel %vm406, %v401, %v407
    %v425 = vsel %vm412, %v409, %v413
    %v426 = vsel %vm418, %v415, %v419
    %v427 = vmul.f32 %v396, %v258
    %v428 = vmul.f32 %v424, %v259
    %v429 = vmul.f32 %v425, %v260
    %v430 = vmul.f32 %v426, %v261
    %v431 = vmul.f32 %v421, %v262
    %437 = vrot.lane.b32.xlu0 %v258, 64
    %v438 = vpop.permute.xlu0 %437
    %439 = vrot.lane.b32.xlu0 %v259, 64
    %v440 = vpop.permute.xlu0 %439
    %441 = vrot.lane.b32.xlu0 %v260, 64
    %v442 = vpop.permute.xlu0 %441
    %443 = vrot.lane.b32.xlu0 %v261, 64
    %v444 = vpop.permute.xlu0 %443
    %445 = vrot.lane.b32.xlu0 %v262, 64
    %v446 = vpop.permute.xlu0 %445
    %v452 = vmul.f32 %v396, %v438
    %v453 = vmul.f32 %v424, %v440
    %v454 = vmul.f32 %v425, %v442
    %v455 = vmul.f32 %v426, %v444
    %v456 = vmul.f32 %v421, %v446
    %460 = vrot.lane.b32.xlu0 %v396, 96
    %v461 = vpop.permute.xlu0 %460
    %462 = vrot.lane.b32.xlu0 %v424, 96
    %v463 = vpop.permute.xlu0 %462
    %464 = vrot.lane.b32.xlu0 %v425, 96
    %v465 = vpop.permute.xlu0 %464
    %466 = vrot.lane.b32.xlu0 %v426, 96
    %v467 = vpop.permute.xlu0 %466
    %468 = vrot.lane.b32.xlu0 %v421, 96
    %v469 = vpop.permute.xlu0 %468
    %v471 = vsel %vm217, %v427, 0
    %v474 = vsel %vm217, %v428, 0
    %v477 = vsel %vm217, %v429, 0
    %v480 = vsel %vm217, %v430, 0
    %v483 = vsel %vm217, %v431, 0
    %v485 = vsel %vm217, %v461, 0
    %v487 = vsel %vm217, %v463, 0
    %v489 = vsel %vm217, %v465, 0
    %v491 = vsel %vm217, %v467, 0
    %v493 = vsel %vm217, %v469, 0
    %495 = vmatprep.subr.mxu0 0.0
    %496 = vmatpush1.xpose.msra.mxu0 %v485
    %497 = vmatprep.subr.mxu0 0.0
    %498 = vmatpush1.xpose.msra.mxu0 %v487
    %499 = vmatprep.subr.mxu0 0.0
    %500 = vmatpush1.xpose.msra.mxu0 %v489
    %501 = vmatprep.subr.mxu0 0.0
    %502 = vmatpush1.xpose.msra.mxu0 %v491
    %503 = vmatprep.subr.mxu0 0.0
    %504 = vmatpush1.xpose.msra.mxu0 %v493
    %505 = vmatprep.subr.mxu0 0.0
    %506 = vmatpush1.xpose.msra.mxu0 0.0
    %507 = vmatprep.subr.mxu0 0.0
    %508 = vmatpush1.xpose.msra.mxu0 0.0
    %509 = vmatprep.subr.mxu0 0.0
    %510 = vmatpush1.xpose.msra.mxu0 0.0
    %511 = vmatprep.subr.mxu0 0.0
    %512 = vmatpush1.xpose.msra.mxu0 0.0
    %513 = vmatprep.subr.mxu0 0.0
    %514 = vmatpush1.xpose.msra.mxu0 0.0
    %515 = vmatprep.subr.mxu0 0.0
    %516 = vmatpush1.xpose.msra.mxu0 0.0
    %517 = vmatprep.subr.mxu0 0.0
    %518 = vmatpush1.xpose.msra.mxu0 0.0
    %519 = vmatprep.subr.mxu0 0.0
    %520 = vmatpush1.xpose.msra.mxu0 0.0
    %521 = vmatprep.subr.mxu0 0.0
    %522 = vmatpush1.xpose.msra.mxu0 0.0
    %523 = vmatprep.subr.mxu0 0.0
    %524 = vmatpush1.xpose.msra.mxu0 0.0
    %525 = vmatprep.subr.mxu0 0.0
    %526 = vmatpush1.xpose.msra.mxu0 0.0
    %527 = vmatprep.subr.mxu0 0.0
    %528 = vmatpush1.xpose.msra.mxu0 0.0
    %529 = vmatprep.subr.mxu0 0.0
    %530 = vmatpush1.xpose.msra.mxu0 0.0
    %531 = vmatprep.subr.mxu0 0.0
    %532 = vmatpush1.xpose.msra.mxu0 0.0
    %533 = vmatprep.subr.mxu0 0.0
    %534 = vmatpush1.xpose.msra.mxu0 0.0
    %535 = vmatprep.subr.mxu0 0.0
    %536 = vmatpush1.xpose.msra.mxu0 0.0
    %537 = vmatprep.subr.mxu0 0.0
    %538 = vmatpush1.xpose.msra.mxu0 0.0
    %539 = vmatprep.subr.mxu0 0.0
    %540 = vmatpush1.xpose.msra.mxu0 0.0
    %541 = vmatprep.subr.mxu0 0.0
    %542 = vmatpush1.xpose.msra.mxu0 0.0
    %543 = vmatprep.subr.mxu0 0.0
    %544 = vmatpush1.xpose.msra.mxu0 0.0
    %545 = vmatprep.subr.mxu0 0.0
    %546 = vmatpush1.xpose.msra.mxu0 0.0
    %547 = vmatprep.subr.mxu0 0.0
    %548 = vmatpush1.xpose.msra.mxu0 0.0
    %549 = vmatprep.subr.mxu0 0.0
    %550 = vmatpush1.xpose.msra.mxu0 0.0
    %551 = vmatprep.subr.mxu0 0.0
    %552 = vmatpush1.xpose.msra.mxu0 0.0
    %553 = vmatprep.subr.mxu0 0.0
    %554 = vmatpush1.xpose.msra.mxu0 0.0
    %555 = vmatprep.subr.mxu0 0.0
    %556 = vmatpush1.xpose.msra.mxu0 0.0
    %557 = vmatprep.subr.mxu0 0.0
    %558 = vmatpush1.xpose.msra.mxu0 0.0
    %559 = vmatprep.mubr.f32.mxu0 0.0
    %560 = vmatmul.mubr.f32.gmra.mrb[0].mxu0 %v471
    %v561 = vpop.f32.mrb[0].mxu0
    %v562 = vadd.f32 %v263, %v561
    %v563 = vpop.f32.mrb[0].mxu0
    %564 = vmatprep.mubr.f32.mxu0 0.0
    %565 = vmatmul.mubr.f32.gmra.mrb[0].mxu0 %v474
    %v566 = vpop.f32.mrb[0].mxu0
    %v567 = vadd.f32 %v264, %v566
    %v568 = vpop.f32.mrb[0].mxu0
    %569 = vmatprep.mubr.f32.mxu0 0.0
    %570 = vmatmul.mubr.f32.gmra.mrb[0].mxu0 %v477
    %v571 = vpop.f32.mrb[0].mxu0
    %v572 = vadd.f32 %v265, %v571
    %v573 = vpop.f32.mrb[0].mxu0
    %574 = vmatprep.mubr.f32.mxu0 0.0
    %575 = vmatmul.mubr.f32.gmra.mrb[0].mxu0 %v480
    %v576 = vpop.f32.mrb[0].mxu0
    %v577 = vadd.f32 %v266, %v576
    %v578 = vpop.f32.mrb[0].mxu0
    %579 = vmatprep.mubr.f32.mxu0 0.0
    %580 = vmatmul.mubr.f32.gmra.mrb[0].mxu0 %v483
    %v581 = vpop.f32.mrb[0].mxu0
    %v582 = vadd.f32 %v267, %v581
    %v583 = vpop.f32.mrb[0].mxu0
    %584 = vdwg.mxu0
    %vm585 = vcmask 326656
    %v586 = vsel %vm585, %v562, -inf
    %587 = vmax.xlane.f32.xlu0 %v586
    %v588 = vpop.xlane.xlu0 %587
    %v589 = vsel %vm585, %v567, -inf
    %590 = vmax.xlane.f32.xlu0 %v589
    %v591 = vpop.xlane.xlu0 %590
    %v592 = vsel %vm585, %v572, -inf
    %593 = vmax.xlane.f32.xlu0 %v592
    %v594 = vpop.xlane.xlu0 %593
    %v595 = vsel %vm585, %v577, -inf
    %596 = vmax.xlane.f32.xlu0 %v595
    %v597 = vpop.xlane.xlu0 %596
    %v598 = vsel %vm585, %v582, -inf
    %599 = vmax.xlane.f32.xlu0 %v598
    %v600 = vpop.xlane.xlu0 %599
    %v601 = vsub.f32 %v562, %v588
    %v602 = vsub.f32 %v567, %v591
    %v603 = vsub.f32 %v572, %v594
    %v604 = vsub.f32 %v577, %v597
    %v605 = vsub.f32 %v582, %v600
    %v606 = vmul.f32 %v601, 1.442695
    %v607 = vpow.pop %v606
    %v608 = vmul.f32 %v602, 1.442695
    %v609 = vpow.pop %v608
    %v610 = vmul.f32 %v603, 1.442695
    %v611 = vpow.pop %v610
    %v612 = vmul.f32 %v604, 1.442695
    %v613 = vpow.pop %v612
    %v614 = vmul.f32 %v605, 1.442695
    %v615 = vpow.pop %v614
    %v616 = vsel %vm585, %v607, 0.0
    %617 = vadd.xlane.f32.xlu0 %v616
    %v618 = vpop.xlane.xlu0 %617
    %v619 = vsel %vm585, %v609, 0.0
    %620 = vadd.xlane.f32.xlu0 %v619
    %v621 = vpop.xlane.xlu0 %620
    %v622 = vsel %vm585, %v611, 0.0
    %623 = vadd.xlane.f32.xlu0 %v622
    %v624 = vpop.xlane.xlu0 %623
    %v625 = vsel %vm585, %v613, 0.0
    %626 = vadd.xlane.f32.xlu0 %v625
    %v627 = vpop.xlane.xlu0 %626
    %v628 = vsel %vm585, %v615, 0.0
    %629 = vadd.xlane.f32.xlu0 %v628
    %v630 = vpop.xlane.xlu0 %629
    %v631 = vrcp.pop %v618
    %v632 = vrcp.pop %v621
    %v633 = vrcp.pop %v624
    %v634 = vrcp.pop %v627
    %v635 = vrcp.pop %v630
    %v636 = vmul.f32 %v607, %v631
    %v637 = vmul.f32 %v609, %v632
    %v638 = vmul.f32 %v611, %v633
    %v639 = vmul.f32 %v613, %v634
    %v640 = vmul.f32 %v615, %v635
    %646 = vrot.lane.b32.xlu0 %v452, 64
    %v647 = vpop.permute.xlu0 %646
    %648 = vrot.lane.b32.xlu0 %v453, 64
    %v649 = vpop.permute.xlu0 %648
    %650 = vrot.lane.b32.xlu0 %v454, 64
    %v651 = vpop.permute.xlu0 %650
    %652 = vrot.lane.b32.xlu0 %v455, 64
    %v653 = vpop.permute.xlu0 %652
    %654 = vrot.lane.b32.xlu0 %v456, 64
    %v655 = vpop.permute.xlu0 %654
    %v662 = vsel %vm585, %v636, 0
    %v665 = vsel %vm585, %v637, 0
    %v668 = vsel %vm585, %v638, 0
    %v671 = vsel %vm585, %v639, 0
    %v674 = vsel %vm585, %v640, 0
    %676 = vmatprep.subr.mxu0 0.0
    %677 = vmatpush1.msra.mxu0 %v647
    %678 = vmatprep.subr.mxu0 0.0
    %679 = vmatpush1.msra.mxu0 %v649
    %680 = vmatprep.subr.mxu0 0.0
    %681 = vmatpush1.msra.mxu0 %v651
    %682 = vmatprep.subr.mxu0 0.0
    %683 = vmatpush1.msra.mxu0 %v653
    %684 = vmatprep.subr.mxu0 0.0
    %685 = vmatpush1.msra.mxu0 %v655
    %686 = vmatprep.subr.mxu0 0.0
    %687 = vmatpush1.msra.mxu0 0.0
    %688 = vmatprep.subr.mxu0 0.0
    %689 = vmatpush1.msra.mxu0 0.0
    %690 = vmatprep.subr.mxu0 0.0
    %691 = vmatpush1.msra.mxu0 0.0
    %692 = vmatprep.subr.mxu0 0.0
    %693 = vmatpush1.msra.mxu0 0.0
    %694 = vmatprep.subr.mxu0 0.0
    %695 = vmatpush1.msra.mxu0 0.0
    %696 = vmatprep.subr.mxu0 0.0
    %697 = vmatpush1.msra.mxu0 0.0
    %698 = vmatprep.subr.mxu0 0.0
    %699 = vmatpush1.msra.mxu0 0.0
    %700 = vmatprep.subr.mxu0 0.0
    %701 = vmatpush1.msra.mxu0 0.0
    %702 = vmatprep.subr.mxu0 0.0
    %703 = vmatpush1.msra.mxu0 0.0
    %704 = vmatprep.subr.mxu0 0.0
    %705 = vmatpush1.msra.mxu0 0.0
    %706 = vmatprep.subr.mxu0 0.0
    %707 = vmatpush1.msra.mxu0 0.0
    %708 = vmatprep.subr.mxu0 0.0
    %709 = vmatpush1.msra.mxu0 0.0
    %710 = vmatprep.subr.mxu0 0.0
    %711 = vmatpush1.msra.mxu0 0.0
    %712 = vmatprep.subr.mxu0 0.0
    %713 = vmatpush1.msra.mxu0 0.0
    %714 = vmatprep.subr.mxu0 0.0
    %715 = vmatpush1.msra.mxu0 0.0
    %716 = vmatprep.subr.mxu0 0.0
    %717 = vmatpush1.msra.mxu0 0.0
    %718 = vmatprep.subr.mxu0 0.0
    %719 = vmatpush1.msra.mxu0 0.0
    %720 = vmatprep.subr.mxu0 0.0
    %721 = vmatpush1.msra.mxu0 0.0
    %722 = vmatprep.subr.mxu0 0.0
    %723 = vmatpush1.msra.mxu0 0.0
    %724 = vmatprep.subr.mxu0 0.0
    %725 = vmatpush1.msra.mxu0 0.0
    %726 = vmatprep.subr.mxu0 0.0
    %727 = vmatpush1.msra.mxu0 0.0
    %728 = vmatprep.subr.mxu0 0.0
    %729 = vmatpush1.msra.mxu0 0.0
    %730 = vmatprep.subr.mxu0 0.0
    %731 = vmatpush1.msra.mxu0 0.0
    %732 = vmatprep.subr.mxu0 0.0
    %733 = vmatpush1.msra.mxu0 0.0
    %734 = vmatprep.subr.mxu0 0.0
    %735 = vmatpush1.msra.mxu0 0.0
    %736 = vmatprep.subr.mxu0 0.0
    %737 = vmatpush1.msra.mxu0 0.0
    %738 = vmatprep.subr.mxu0 0.0
    %739 = vmatpush1.msra.mxu0 0.0
    %740 = vmatprep.mubr.f32.mxu0 0.0
    %741 = vmatmul.mubr.f32.gmra.mrb[0].mxu0 %v662
    %v742 = vpop.f32.mrb[0].mxu0
    %v743 = vadd.f32 0.0, %v742
    %v744 = vpop.f32.mrb[0].mxu0
    %745 = vmatprep.mubr.f32.mxu0 0.0
    %746 = vmatmul.mubr.f32.gmra.mrb[0].mxu0 %v665
    %v747 = vpop.f32.mrb[0].mxu0
    %v748 = vadd.f32 0.0, %v747
    %v749 = vpop.f32.mrb[0].mxu0
    %750 = vmatprep.mubr.f32.mxu0 0.0
    %751 = vmatmul.mubr.f32.gmra.mrb[0].mxu0 %v668
    %v752 = vpop.f32.mrb[0].mxu0
    %v753 = vadd.f32 0.0, %v752
    %v754 = vpop.f32.mrb[0].mxu0
    %755 = vmatprep.mubr.f32.mxu0 0.0
    %756 = vmatmul.mubr.f32.gmra.mrb[0].mxu0 %v671
    %v757 = vpop.f32.mrb[0].mxu0
    %v758 = vadd.f32 0.0, %v757
    %v759 = vpop.f32.mrb[0].mxu0
    %760 = vmatprep.mubr.f32.mxu0 0.0
    %761 = vmatmul.mubr.f32.gmra.mrb[0].mxu0 %v674
    %v762 = vpop.f32.mrb[0].mxu0
    %v763 = vadd.f32 0.0, %v762
    %v764 = vpop.f32.mrb[0].mxu0
    %765 = vdwg.mxu0
    %v768 = vrot.slane %v748, 2
    %v769 = vrot.slane %v753, 2
    %v770 = vsel %vm418, %v768, %v769
    %v773 = vadd.f32 %v743, %v770
    %v774 = vadd.f32 %v748, %v769
    %v776 = vrot.slane %v753, 4
    %v777 = vrot.slane %v758, 4
    %v778 = vsel %vm412, %v776, %v777
    %v781 = vadd.f32 %v773, %v778
    %v782 = vadd.f32 %v774, %v777
    %v784 = vrot.slane %v758, 6
    %v785 = vrot.slane %v763, 6
    %v786 = vsel %vm406, %v784, %v785
    %v789 = vadd.f32 %v781, %v786
    %v790 = vadd.f32 %v782, %v785
    %v792 = vsel %vm217, %v789, 0
    %v795 = vsel %vm217, %v790, 0
    %797 = vmatprep.subr.mxu0 0.0
    %798 = vmatpush1.msra.mxu0 %v272
    %799 = vmatprep.subr.mxu0 0.0
    %800 = vmatpush1.msra.mxu0 %v273
    %801 = vmatprep.subr.mxu0 0.0
    %802 = vmatpush1.msra.mxu0 %v274
    %803 = vmatprep.subr.mxu0 0.0
    %804 = vmatpush1.msra.mxu0 %v275
    %805 = vmatprep.subr.mxu0 0.0
    %806 = vmatpush1.msra.mxu0 0.0
    %807 = vmatprep.subr.mxu0 0.0
    %808 = vmatpush1.msra.mxu0 0.0
    %809 = vmatprep.subr.mxu0 0.0
    %810 = vmatpush1.msra.mxu0 0.0
    %811 = vmatprep.subr.mxu0 0.0
    %812 = vmatpush1.msra.mxu0 0.0
    %813 = vmatprep.subr.mxu0 0.0
    %814 = vmatpush1.msra.mxu0 0.0
    %815 = vmatprep.subr.mxu0 0.0
    %816 = vmatpush1.msra.mxu0 0.0
    %817 = vmatprep.subr.mxu0 0.0
    %818 = vmatpush1.msra.mxu0 0.0
    %819 = vmatprep.subr.mxu0 0.0
    %820 = vmatpush1.msra.mxu0 0.0
    %821 = vmatprep.subr.mxu0 0.0
    %822 = vmatpush1.msra.mxu0 0.0
    %823 = vmatprep.subr.mxu0 0.0
    %824 = vmatpush1.msra.mxu0 0.0
    %825 = vmatprep.subr.mxu0 0.0
    %826 = vmatpush1.msra.mxu0 0.0
    %827 = vmatprep.subr.mxu0 0.0
    %828 = vmatpush1.msra.mxu0 0.0
    %829 = vmatprep.subr.mxu0 0.0
    %830 = vmatpush1.msra.mxu0 0.0
    %831 = vmatprep.subr.mxu0 0.0
    %832 = vmatpush1.msra.mxu0 0.0
    %833 = vmatprep.subr.mxu0 0.0
    %834 = vmatpush1.msra.mxu0 0.0
    %835 = vmatprep.subr.mxu0 0.0
    %836 = vmatpush1.msra.mxu0 0.0
    %837 = vmatprep.subr.mxu0 0.0
    %838 = vmatpush1.msra.mxu0 0.0
    %839 = vmatprep.subr.mxu0 0.0
    %840 = vmatpush1.msra.mxu0 0.0
    %841 = vmatprep.subr.mxu0 0.0
    %842 = vmatpush1.msra.mxu0 0.0
    %843 = vmatprep.subr.mxu0 0.0
    %844 = vmatpush1.msra.mxu0 0.0
    %845 = vmatprep.subr.mxu0 0.0
    %846 = vmatpush1.msra.mxu0 0.0
    %847 = vmatprep.subr.mxu0 0.0
    %848 = vmatpush1.msra.mxu0 0.0
    %849 = vmatprep.subr.mxu0 0.0
    %850 = vmatpush1.msra.mxu0 0.0
    %851 = vmatprep.subr.mxu0 0.0
    %852 = vmatpush1.msra.mxu0 0.0
    %853 = vmatprep.subr.mxu0 0.0
    %854 = vmatpush1.msra.mxu0 0.0
    %855 = vmatprep.subr.mxu0 0.0
    %856 = vmatpush1.msra.mxu0 0.0
    %857 = vmatprep.subr.mxu0 0.0
    %858 = vmatpush1.msra.mxu0 0.0
    %859 = vmatprep.subr.mxu0 0.0
    %860 = vmatpush1.msra.mxu0 0.0
    %861 = vmatprep.mubr.f32.mxu0 0.0
    %862 = vmatmul.mubr.f32.gmra.mrb[0].mxu0 %v792
    %v863 = vpop.f32.mrb[0].mxu0
    %v864 = vadd.f32 0.0, %v863
    %v865 = vpop.f32.mrb[0].mxu0
    %866 = vmatprep.mubr.f32.mxu0 0.0
    %867 = vmatmul.mubr.f32.gmra.mrb[0].mxu0 %v795
    %v868 = vpop.f32.mrb[0].mxu0
    %v869 = vadd.f32 0.0, %v868
    %v870 = vpop.f32.mrb[0].mxu0
    %871 = vdwg.mxu0
    %v872 = vadd.f32 %v256, %v864
    %v873 = vadd.f32 %v257, %v869
    %v874 = vlaneseq
    %v875 = vshrl.u32 %v874, 7
    %v876 = vsub.s32 5, %v875
    %v877 = vrot.slane %v280, %v876
    %v878 = vadd.f32 %v872, %v877
    %v879 = vadd.f32 %v873, %v877
    %v880 = vsel %vm217, %v878, 0.0
    %881 = vadd.xlane.f32.xlu0 %v880
    %v882 = vpop.xlane.xlu0 %881
    %v883 = vsel %vm221, %v879, 0.0
    %884 = vadd.xlane.f32.xlu0 %v883
    %v885 = vpop.xlane.xlu0 %884
    %v886 = vmul.f32 %v882, %v225
    %v887 = vmul.f32 %v885, %v225
    %v888 = vsub.f32 %v878, %v886
    %v889 = vsub.f32 %v879, %v887
    %v890 = vmul.f32 %v888, %v888
    %v891 = vmul.f32 %v889, %v889
    %v892 = vsel %vm217, %v890, 0.0
    %893 = vadd.xlane.f32.xlu0 %v892
    %v894 = vpop.xlane.xlu0 %893
    %v895 = vsel %vm221, %v891, 0.0
    %896 = vadd.xlane.f32.xlu0 %v895
    %v897 = vpop.xlane.xlu0 %896
    %v898 = vmul.f32 %v894, %v225
    %v899 = vmul.f32 %v897, %v225
    %v900 = vadd.f32 %v898, 1e-05
    %v901 = vadd.f32 %v899, 1e-05
    %v902 = vrsqrt.pop %v900
    %v903 = vrsqrt.pop %v901
    %v904 = vmul.f32 %v888, %v902
    %v905 = vmul.f32 %v889, %v903
    %v906 = vlaneseq
    %v907 = vshrl.u32 %v906, 7
    %v908 = vsub.s32 2, %v907
    %v909 = vrot.slane %v280, %v908
    %v910 = vmul.f32 %v904, %v909
    %v911 = vmul.f32 %v905, %v909
    %v912 = vlaneseq
    %v913 = vshrl.u32 %v912, 7
    %v914 = vsub.s32 3, %v913
    %v915 = vrot.slane %v280, %v914
    %v916 = vadd.f32 %v910, %v915
    %v917 = vadd.f32 %v911, %v915
    %v918 = vlaneseq
    %v919 = vshrl.u32 %v918, 7
    %v920 = vsub.s32 6, %v919
    %v921 = vrot.slane %v280, %v920
    %v923 = vsel %vm217, %v916, 0
    %v926 = vsel %vm217, %v917, 0
    %928 = vmatprep.subr.mxu0 0.0
    %929 = vmatpush1.msra.mxu0 %v276
    %930 = vmatprep.subr.mxu0 0.0
    %931 = vmatpush1.msra.mxu0 %v277
    %932 = vmatprep.subr.mxu0 0.0
    %933 = vmatpush1.msra.mxu0 %v278
    %934 = vmatprep.subr.mxu0 0.0
    %935 = vmatpush1.msra.mxu0 %v279
    %936 = vmatprep.subr.mxu0 0.0
    %937 = vmatpush1.msra.mxu0 0.0
    %938 = vmatprep.subr.mxu0 0.0
    %939 = vmatpush1.msra.mxu0 0.0
    %940 = vmatprep.subr.mxu0 0.0
    %941 = vmatpush1.msra.mxu0 0.0
    %942 = vmatprep.subr.mxu0 0.0
    %943 = vmatpush1.msra.mxu0 0.0
    %944 = vmatprep.subr.mxu0 0.0
    %945 = vmatpush1.msra.mxu0 0.0
    %946 = vmatprep.subr.mxu0 0.0
    %947 = vmatpush1.msra.mxu0 0.0
    %948 = vmatprep.subr.mxu0 0.0
    %949 = vmatpush1.msra.mxu0 0.0
    %950 = vmatprep.subr.mxu0 0.0
    %951 = vmatpush1.msra.mxu0 0.0
    %952 = vmatprep.subr.mxu0 0.0
    %953 = vmatpush1.msra.mxu0 0.0
    %954 = vmatprep.subr.mxu0 0.0
    %955 = vmatpush1.msra.mxu0 0.0
    %956 = vmatprep.subr.mxu0 0.0
    %957 = vmatpush1.msra.mxu0 0.0
    %958 = vmatprep.subr.mxu0 0.0
    %959 = vmatpush1.msra.mxu0 0.0
    %960 = vmatprep.subr.mxu0 0.0
    %961 = vmatpush1.msra.mxu0 0.0
    %962 = vmatprep.subr.mxu0 0.0
    %963 = vmatpush1.msra.mxu0 0.0
    %964 = vmatprep.subr.mxu0 0.0
    %965 = vmatpush1.msra.mxu0 0.0
    %966 = vmatprep.subr.mxu0 0.0
    %967 = vmatpush1.msra.mxu0 0.0
    %968 = vmatprep.subr.mxu0 0.0
    %969 = vmatpush1.msra.mxu0 0.0
    %970 = vmatprep.subr.mxu0 0.0
    %971 = vmatpush1.msra.mxu0 0.0
    %972 = vmatprep.subr.mxu0 0.0
    %973 = vmatpush1.msra.mxu0 0.0
    %974 = vmatprep.subr.mxu0 0.0
    %975 = vmatpush1.msra.mxu0 0.0
    %976 = vmatprep.subr.mxu0 0.0
    %977 = vmatpush1.msra.mxu0 0.0
    %978 = vmatprep.subr.mxu0 0.0
    %979 = vmatpush1.msra.mxu0 0.0
    %980 = vmatprep.subr.mxu0 0.0
    %981 = vmatpush1.msra.mxu0 0.0
    %982 = vmatprep.subr.mxu0 0.0
    %983 = vmatpush1.msra.mxu0 0.0
    %984 = vmatprep.subr.mxu0 0.0
    %985 = vmatpush1.msra.mxu0 0.0
    %986 = vmatprep.subr.mxu0 0.0
    %987 = vmatpush1.msra.mxu0 0.0
    %988 = vmatprep.subr.mxu0 0.0
    %989 = vmatpush1.msra.mxu0 0.0
    %990 = vmatprep.subr.mxu0 0.0
    %991 = vmatpush1.msra.mxu0 0.0
    %992 = vmatprep.mubr.f32.mxu0 0.0
    %993 = vmatmul.mubr.f32.gmra.mrb[0].mxu0 %v923
    %v994 = vpop.f32.mrb[0].mxu0
    %v995 = vadd.f32 %v921, %v994
    %v996 = vpop.f32.mrb[0].mxu0
    %997 = vmatprep.mubr.f32.mxu0 0.0
    %998 = vmatmul.mubr.f32.gmra.mrb[0].mxu0 %v926
    %v999 = vpop.f32.mrb[0].mxu0
    %v1000 = vadd.f32 %v921, %v999
    %v1001 = vpop.f32.mrb[0].mxu0
    %1002 = vdwg.mxu0
    %v1003 = vmul.f32 %v995, %v995
    %v1004 = vmul.f32 %v1000, %v1000
    %v1005 = vmul.f32 %v995, %v1003
    %v1006 = vmul.f32 %v1000, %v1004
    %v1007 = vmul.f32 %v1005, 0.044715
    %v1008 = vmul.f32 %v1006, 0.044715
    %v1009 = vadd.f32 %v995, %v1007
    %v1010 = vadd.f32 %v1000, %v1008
    %v1011 = vmul.f32 %v1009, 0.7978846
    %v1012 = vmul.f32 %v1010, 0.7978846
    %v1013 = vtanh.pop %v1011
    %v1014 = vtanh.pop %v1012
    %v1015 = vadd.f32 %v1013, 1.0
    %v1016 = vadd.f32 %v1014, 1.0
    %v1017 = vmul.f32 %v1015, 0.5
    %v1018 = vmul.f32 %v1016, 0.5
    %v1019 = vmul.f32 %v995, %v1017
    %v1020 = vmul.f32 %v1000, %v1018
    %v1021 = vld [vmem:[%s3] sm:$0xff]
    %v1022 = vld [vmem:[%s3 + $0x8] sm:$0xff]
    %v1023 = vld [vmem:[%s3 + $0x10] sm:$0xff]
    %v1024 = vld [vmem:[%s3 + $0x18] sm:$0xff]
    %v1025 = vld [vmem:[%s3 + $0x20] sm:$0xff]
    %v1026 = vld [vmem:[%s3 + $0x28] sm:$0xff]
    %v1027 = vld [vmem:[%s3 + $0x30] sm:$0xff]
    %v1028 = vld [vmem:[%s3 + $0x38] sm:$0xff]
    %v1029 = vld [vmem:[%s3 + $0x40] sm:$0xff]
    %v1030 = vld [vmem:[%s3 + $0x48] sm:$0xff]
    %v1031 = vld [vmem:[%s3 + $0x50] sm:$0xff]
    %v1032 = vld [vmem:[%s3 + $0x58] sm:$0xff]
    %v1033 = vld [vmem:[%s3 + $0x60] sm:$0xff]
    %v1034 = vld [vmem:[%s3 + $0x68] sm:$0xff]
    %v1035 = vld [vmem:[%s3 + $0x70] sm:$0xff]
    %v1036 = vld [vmem:[%s3 + $0x78] sm:$0xff]
    %v1037 = vlaneseq
    %v1038 = vshrl.u32 %v1037, 7
    %v1039 = vsub.s32 7, %v1038
    %v1040 = vrot.slane %v280, %v1039
    %1041 = vmatprep.subr.mxu0 0.0
    %1042 = vmatpush1.msra.mxu0 %v1021
    %1043 = vmatprep.subr.mxu0 0.0
    %1044 = vmatpush1.msra.mxu0 %v1022
    %1045 = vmatprep.subr.mxu0 0.0
    %1046 = vmatpush1.msra.mxu0 %v1023
    %1047 = vmatprep.subr.mxu0 0.0
    %1048 = vmatpush1.msra.mxu0 %v1024
    %1049 = vmatprep.subr.mxu0 0.0
    %1050 = vmatpush1.msra.mxu0 %v1025
    %1051 = vmatprep.subr.mxu0 0.0
    %1052 = vmatpush1.msra.mxu0 %v1026
    %1053 = vmatprep.subr.mxu0 0.0
    %1054 = vmatpush1.msra.mxu0 %v1027
    %1055 = vmatprep.subr.mxu0 0.0
    %1056 = vmatpush1.msra.mxu0 %v1028
    %1057 = vmatprep.subr.mxu0 0.0
    %1058 = vmatpush1.msra.mxu0 %v1029
    %1059 = vmatprep.subr.mxu0 0.0
    %1060 = vmatpush1.msra.mxu0 %v1030
    %1061 = vmatprep.subr.mxu0 0.0
    %1062 = vmatpush1.msra.mxu0 %v1031
    %1063 = vmatprep.subr.mxu0 0.0
    %1064 = vmatpush1.msra.mxu0 %v1032
    %1065 = vmatprep.subr.mxu0 0.0
    %1066 = vmatpush1.msra.mxu0 %v1033
    %1067 = vmatprep.subr.mxu0 0.0
    %1068 = vmatpush1.msra.mxu0 %v1034
    %1069 = vmatprep.subr.mxu0 0.0
    %1070 = vmatpush1.msra.mxu0 %v1035
    %1071 = vmatprep.subr.mxu0 0.0
    %1072 = vmatpush1.msra.mxu0 %v1036
    %1073 = vmatprep.subr.mxu0 0.0
    %1074 = vmatpush1.msra.mxu0 0.0
    %1075 = vmatprep.subr.mxu0 0.0
    %1076 = vmatpush1.msra.mxu0 0.0
    %1077 = vmatprep.subr.mxu0 0.0
    %1078 = vmatpush1.msra.mxu0 0.0
    %1079 = vmatprep.subr.mxu0 0.0
    %1080 = vmatpush1.msra.mxu0 0.0
    %1081 = vmatprep.subr.mxu0 0.0
    %1082 = vmatpush1.msra.mxu0 0.0
    %1083 = vmatprep.subr.mxu0 0.0
    %1084 = vmatpush1.msra.mxu0 0.0
    %1085 = vmatprep.subr.mxu0 0.0
    %1086 = vmatpush1.msra.mxu0 0.0
    %1087 = vmatprep.subr.mxu0 0.0
    %1088 = vmatpush1.msra.mxu0 0.0
    %1089 = vmatprep.subr.mxu0 0.0
    %1090 = vmatpush1.msra.mxu0 0.0
    %1091 = vmatprep.subr.mxu0 0.0
    %1092 = vmatpush1.msra.mxu0 0.0
    %1093 = vmatprep.subr.mxu0 0.0
    %1094 = vmatpush1.msra.mxu0 0.0
    %1095 = vmatprep.subr.mxu0 0.0
    %1096 = vmatpush1.msra.mxu0 0.0
    %1097 = vmatprep.subr.mxu0 0.0
    %1098 = vmatpush1.msra.mxu0 0.0
    %1099 = vmatprep.subr.mxu0 0.0
    %1100 = vmatpush1.msra.mxu0 0.0
    %1101 = vmatprep.subr.mxu0 0.0
    %1102 = vmatpush1.msra.mxu0 0.0
    %1103 = vmatprep.subr.mxu0 0.0
    %1104 = vmatpush1.msra.mxu0 0.0
    %1105 = vmatprep.mubr.f32.mxu0 0.0
    %1106 = vmatmul.mubr.f32.gmra.mrb[0].mxu0 %v1019
    %v1107 = vpop.f32.mrb[0].mxu0
    %v1108 = vadd.f32 %v1040, %v1107
    %v1109 = vpop.f32.mrb[0].mxu0
    %1110 = vmatprep.mubr.f32.mxu0 0.0
    %1111 = vmatmul.mubr.f32.gmra.mrb[0].mxu0 %v1020
    %v1112 = vpop.f32.mrb[0].mxu0
    %v1113 = vadd.f32 %v1040, %v1112
    %v1114 = vpop.f32.mrb[0].mxu0
    %1115 = vdwg.mxu0
    %v1116 = vadd.f32 %v878, %v1108
    %v1117 = vadd.f32 %v879, %v1113
    %s1118 = scalar_lea.vmem %s2, 96
    %v1119 = vld [vmem:[%s1118] sm:$0xff]
    %v1120 = vld [vmem:[%s1118 + $0x8] sm:$0xff]
    %v1121 = vld [vmem:[%s1118 + $0x10] sm:$0xff]
    %v1122 = vld [vmem:[%s1118 + $0x18] sm:$0xff]
    %v1123 = vld [vmem:[%s1118 + $0x20] sm:$0xff]
    %v1124 = vld [vmem:[%s1118 + $0x28] sm:$0xff]
    %v1125 = vld [vmem:[%s1118 + $0x30] sm:$0xff]
    %v1126 = vld [vmem:[%s1118 + $0x38] sm:$0xff]
    %v1127 = vld [vmem:[%s1118 + $0x40] sm:$0xff]
    %v1128 = vld [vmem:[%s1118 + $0x48] sm:$0xff]
    %v1129 = vld [vmem:[%s1118 + $0x50] sm:$0xff]
    %v1130 = vld [vmem:[%s1118 + $0x58] sm:$0xff]
    %v1131 = vld [vmem:[%s1 + $0x90] sm:$0xff]
    %v1132 = vsel %vm217, %v1116, 0.0
    %1133 = vadd.xlane.f32.xlu0 %v1132
    %v1134 = vpop.xlane.xlu0 %1133
    %v1135 = vsel %vm221, %v1117, 0.0
    %1136 = vadd.xlane.f32.xlu0 %v1135
    %v1137 = vpop.xlane.xlu0 %1136
    %v1138 = vmul.f32 %v1134, %v225
    %v1139 = vmul.f32 %v1137, %v225
    %v1140 = vsub.f32 %v1116, %v1138
    %v1141 = vsub.f32 %v1117, %v1139
    %v1142 = vmul.f32 %v1140, %v1140
    %v1143 = vmul.f32 %v1141, %v1141
    %v1144 = vsel %vm217, %v1142, 0.0
    %1145 = vadd.xlane.f32.xlu0 %v1144
    %v1146 = vpop.xlane.xlu0 %1145
    %v1147 = vsel %vm221, %v1143, 0.0
    %1148 = vadd.xlane.f32.xlu0 %v1147
    %v1149 = vpop.xlane.xlu0 %1148
    %v1150 = vmul.f32 %v1146, %v225
    %v1151 = vmul.f32 %v1149, %v225
    %v1152 = vadd.f32 %v1150, 1e-05
    %v1153 = vadd.f32 %v1151, 1e-05
    %v1154 = vrsqrt.pop %v1152
    %v1155 = vrsqrt.pop %v1153
    %v1156 = vmul.f32 %v1140, %v1154
    %v1157 = vmul.f32 %v1141, %v1155
    %v1158 = vlaneseq
    %v1159 = vshrl.u32 %v1158, 7
    %v1160 = vsub.s32 0, %v1159
    %v1161 = vrot.slane %v1131, %v1160
    %v1162 = vmul.f32 %v1156, %v1161
    %v1163 = vmul.f32 %v1157, %v1161
    %v1164 = vlaneseq
    %v1165 = vshrl.u32 %v1164, 7
    %v1166 = vsub.s32 1, %v1165
    %v1167 = vrot.slane %v1131, %v1166
    %v1168 = vadd.f32 %v1162, %v1167
    %v1169 = vadd.f32 %v1163, %v1167
    %v1170 = vlaneseq
    %v1171 = vshrl.u32 %v1170, 7
    %v1172 = vsub.s32 4, %v1171
    %v1173 = vrot.slane %v1131, %v1172
    %v1175 = vsel %vm217, %v1168, 0
    %v1178 = vsel %vm217, %v1169, 0
    %1180 = vmatprep.subr.mxu0 0.0
    %1181 = vmatpush1.msra.mxu0 %v1119
    %1182 = vmatprep.subr.mxu0 0.0
    %1183 = vmatpush1.msra.mxu0 %v1120
    %1184 = vmatprep.subr.mxu0 0.0
    %1185 = vmatpush1.msra.mxu0 %v1121
    %1186 = vmatprep.subr.mxu0 0.0
    %1187 = vmatpush1.msra.mxu0 %v1122
    %1188 = vmatprep.subr.mxu0 0.0
    %1189 = vmatpush1.msra.mxu0 0.0
    %1190 = vmatprep.subr.mxu0 0.0
    %1191 = vmatpush1.msra.mxu0 0.0
    %1192 = vmatprep.subr.mxu0 0.0
    %1193 = vmatpush1.msra.mxu0 0.0
    %1194 = vmatprep.subr.mxu0 0.0
    %1195 = vmatpush1.msra.mxu0 0.0
    %1196 = vmatprep.subr.mxu0 0.0
    %1197 = vmatpush1.msra.mxu0 0.0
    %1198 = vmatprep.subr.mxu0 0.0
    %1199 = vmatpush1.msra.mxu0 0.0
    %1200 = vmatprep.subr.mxu0 0.0
    %1201 = vmatpush1.msra.mxu0 0.0
    %1202 = vmatprep.subr.mxu0 0.0
    %1203 = vmatpush1.msra.mxu0 0.0
    %1204 = vmatprep.subr.mxu0 0.0
    %1205 = vmatpush1.msra.mxu0 0.0
    %1206 = vmatprep.subr.mxu0 0.0
    %1207 = vmatpush1.msra.mxu0 0.0
    %1208 = vmatprep.subr.mxu0 0.0
    %1209 = vmatpush1.msra.mxu0 0.0
    %1210 = vmatprep.subr.mxu0 0.0
    %1211 = vmatpush1.msra.mxu0 0.0
    %1212 = vmatprep.subr.mxu0 0.0
    %1213 = vmatpush1.msra.mxu0 0.0
    %1214 = vmatprep.subr.mxu0 0.0
    %1215 = vmatpush1.msra.mxu0 0.0
    %1216 = vmatprep.subr.mxu0 0.0
    %1217 = vmatpush1.msra.mxu0 0.0
    %1218 = vmatprep.subr.mxu0 0.0
    %1219 = vmatpush1.msra.mxu0 0.0
    %1220 = vmatprep.subr.mxu0 0.0
    %1221 = vmatpush1.msra.mxu0 0.0
    %1222 = vmatprep.subr.mxu0 0.0
    %1223 = vmatpush1.msra.mxu0 0.0
    %1224 = vmatprep.subr.mxu0 0.0
    %1225 = vmatpush1.msra.mxu0 0.0
    %1226 = vmatprep.subr.mxu0 0.0
    %1227 = vmatpush1.msra.mxu0 0.0
    %1228 = vmatprep.subr.mxu0 0.0
    %1229 = vmatpush1.msra.mxu0 0.0
    %1230 = vmatprep.subr.mxu0 0.0
    %1231 = vmatpush1.msra.mxu0 0.0
    %1232 = vmatprep.subr.mxu0 0.0
    %1233 = vmatpush1.msra.mxu0 0.0
    %1234 = vmatprep.subr.mxu0 0.0
    %1235 = vmatpush1.msra.mxu0 0.0
    %1236 = vmatprep.subr.mxu0 0.0
    %1237 = vmatpush1.msra.mxu0 0.0
    %1238 = vmatprep.subr.mxu0 0.0
    %1239 = vmatpush1.msra.mxu0 0.0
    %1240 = vmatprep.subr.mxu0 0.0
    %1241 = vmatpush1.msra.mxu0 0.0
    %1242 = vmatprep.subr.mxu0 0.0
    %1243 = vmatpush1.msra.mxu0 0.0
    %1244 = vmatprep.mubr.f32.mxu0 0.0
    %1245 = vmatmul.mubr.f32.gmra.mrb[0].mxu0 %v1175
    %v1246 = vpop.f32.mrb[0].mxu0
    %v1247 = vadd.f32 %v1173, %v1246
    %v1248 = vpop.f32.mrb[0].mxu0
    %1249 = vmatprep.mubr.f32.mxu0 0.0
    %1250 = vmatmul.mubr.f32.gmra.mrb[0].mxu0 %v1178
    %v1251 = vpop.f32.mrb[0].mxu0
    %v1252 = vadd.f32 %v1173, %v1251
    %v1253 = vpop.f32.mrb[0].mxu0
    %1254 = vdwg.mxu0
    %v1257 = vrot.slane %v1247, 6
    %v1258 = vrot.slane %v1252, 6
    %v1259 = vsel %vm406, %v1257, %v1258
    %v1262 = vrot.slane %v1247, 4
    %v1263 = vrot.slane %v1252, 4
    %v1264 = vsel %vm412, %v1262, %v1263
    %v1267 = vrot.slane %v1247, 2
    %v1268 = vrot.slane %v1252, 2
    %v1269 = vsel %vm418, %v1267, %v1268
    %v1272 = vsel %vm406, %v1252, %v1257
    %v1273 = vsel %vm412, %v1259, %v1262
    %v1274 = vsel %vm418, %v1264, %v1267
    %v1275 = vmul.f32 %v1247, %v258
    %v1276 = vmul.f32 %v1272, %v259
    %v1277 = vmul.f32 %v1273, %v260
    %v1278 = vmul.f32 %v1274, %v261
    %v1279 = vmul.f32 %v1269, %v262
    %v1280 = vmul.f32 %v1247, %v438
    %v1281 = vmul.f32 %v1272, %v440
    %v1282 = vmul.f32 %v1273, %v442
    %v1283 = vmul.f32 %v1274, %v444
    %v1284 = vmul.f32 %v1269, %v446
    %1288 = vrot.lane.b32.xlu0 %v1247, 96
    %v1289 = vpop.permute.xlu0 %1288
    %1290 = vrot.lane.b32.xlu0 %v1272, 96
    %v1291 = vpop.permute.xlu0 %1290
    %1292 = vrot.lane.b32.xlu0 %v1273, 96
    %v1293 = vpop.permute.xlu0 %1292
    %1294 = vrot.lane.b32.xlu0 %v1274, 96
    %v1295 = vpop.permute.xlu0 %1294
    %1296 = vrot.lane.b32.xlu0 %v1269, 96
    %v1297 = vpop.permute.xlu0 %1296
    %v1299 = vsel %vm217, %v1275, 0
    %v1302 = vsel %vm217, %v1276, 0
    %v1305 = vsel %vm217, %v1277, 0
    %v1308 = vsel %vm217, %v1278, 0
    %v1311 = vsel %vm217, %v1279, 0
    %v1313 = vsel %vm217, %v1289, 0
    %v1315 = vsel %vm217, %v1291, 0
    %v1317 = vsel %vm217, %v1293, 0
    %v1319 = vsel %vm217, %v1295, 0
    %v1321 = vsel %vm217, %v1297, 0
    %1323 = vmatprep.subr.mxu0 0.0
    %1324 = vmatpush1.xpose.msra.mxu0 %v1313
    %1325 = vmatprep.subr.mxu0 0.0
    %1326 = vmatpush1.xpose.msra.mxu0 %v1315
    %1327 = vmatprep.subr.mxu0 0.0
    %1328 = vmatpush1.xpose.msra.mxu0 %v1317
    %1329 = vmatprep.subr.mxu0 0.0
    %1330 = vmatpush1.xpose.msra.mxu0 %v1319
    %1331 = vmatprep.subr.mxu0 0.0
    %1332 = vmatpush1.xpose.msra.mxu0 %v1321
    %1333 = vmatprep.subr.mxu0 0.0
    %1334 = vmatpush1.xpose.msra.mxu0 0.0
    %1335 = vmatprep.subr.mxu0 0.0
    %1336 = vmatpush1.xpose.msra.mxu0 0.0
    %1337 = vmatprep.subr.mxu0 0.0
    %1338 = vmatpush1.xpose.msra.mxu0 0.0
    %1339 = vmatprep.subr.mxu0 0.0
    %1340 = vmatpush1.xpose.msra.mxu0 0.0
    %1341 = vmatprep.subr.mxu0 0.0
    %1342 = vmatpush1.xpose.msra.mxu0 0.0
    %1343 = vmatprep.subr.mxu0 0.0
    %1344 = vmatpush1.xpose.msra.mxu0 0.0
    %1345 = vmatprep.subr.mxu0 0.0
    %1346 = vmatpush1.xpose.msra.mxu0 0.0
    %1347 = vmatprep.subr.mxu0 0.0
    %1348 = vmatpush1.xpose.msra.mxu0 0.0
    %1349 = vmatprep.subr.mxu0 0.0
    %1350 = vmatpush1.xpose.msra.mxu0 0.0
    %1351 = vmatprep.subr.mxu0 0.0
    %1352 = vmatpush1.xpose.msra.mxu0 0.0
    %1353 = vmatprep.subr.mxu0 0.0
    %1354 = vmatpush1.xpose.msra.mxu0 0.0
    %1355 = vmatprep.subr.mxu0 0.0
    %1356 = vmatpush1.xpose.msra.mxu0 0.0
    %1357 = vmatprep.subr.mxu0 0.0
    %1358 = vmatpush1.xpose.msra.mxu0 0.0
    %1359 = vmatprep.subr.mxu0 0.0
    %1360 = vmatpush1.xpose.msra.mxu0 0.0
    %1361 = vmatprep.subr.mxu0 0.0
    %1362 = vmatpush1.xpose.msra.mxu0 0.0
    %1363 = vmatprep.subr.mxu0 0.0
    %1364 = vmatpush1.xpose.msra.mxu0 0.0
    %1365 = vmatprep.subr.mxu0 0.0
    %1366 = vmatpush1.xpose.msra.mxu0 0.0
    %1367 = vmatprep.subr.mxu0 0.0
    %1368 = vmatpush1.xpose.msra.mxu0 0.0
    %1369 = vmatprep.subr.mxu0 0.0
    %1370 = vmatpush1.xpose.msra.mxu0 0.0
    %1371 = vmatprep.subr.mxu0 0.0
    %1372 = vmatpush1.xpose.msra.mxu0 0.0
    %1373 = vmatprep.subr.mxu0 0.0
    %1374 = vmatpush1.xpose.msra.mxu0 0.0
    %1375 = vmatprep.subr.mxu0 0.0
    %1376 = vmatpush1.xpose.msra.mxu0 0.0
    %1377 = vmatprep.subr.mxu0 0.0
    %1378 = vmatpush1.xpose.msra.mxu0 0.0
    %1379 = vmatprep.subr.mxu0 0.0
    %1380 = vmatpush1.xpose.msra.mxu0 0.0
    %1381 = vmatprep.subr.mxu0 0.0
    %1382 = vmatpush1.xpose.msra.mxu0 0.0
    %1383 = vmatprep.subr.mxu0 0.0
    %1384 = vmatpush1.xpose.msra.mxu0 0.0
    %1385 = vmatprep.subr.mxu0 0.0
    %1386 = vmatpush1.xpose.msra.mxu0 0.0
    %1387 = vmatprep.mubr.f32.mxu0 0.0
    %1388 = vmatmul.mubr.f32.gmra.mrb[0].mxu0 %v1299
    %v1389 = vpop.f32.mrb[0].mxu0
    %v1390 = vadd.f32 %v263, %v1389
    %v1391 = vpop.f32.mrb[0].mxu0
    %1392 = vmatprep.mubr.f32.mxu0 0.0
    %1393 = vmatmul.mubr.f32.gmra.mrb[0].mxu0 %v1302
    %v1394 = vpop.f32.mrb[0].mxu0
    %v1395 = vadd.f32 %v264, %v1394
    %v1396 = vpop.f32.mrb[0].mxu0
    %1397 = vmatprep.mubr.f32.mxu0 0.0
    %1398 = vmatmul.mubr.f32.gmra.mrb[0].mxu0 %v1305
    %v1399 = vpop.f32.mrb[0].mxu0
    %v1400 = vadd.f32 %v265, %v1399
    %v1401 = vpop.f32.mrb[0].mxu0
    %1402 = vmatprep.mubr.f32.mxu0 0.0
    %1403 = vmatmul.mubr.f32.gmra.mrb[0].mxu0 %v1308
    %v1404 = vpop.f32.mrb[0].mxu0
    %v1405 = vadd.f32 %v266, %v1404
    %v1406 = vpop.f32.mrb[0].mxu0
    %1407 = vmatprep.mubr.f32.mxu0 0.0
    %1408 = vmatmul.mubr.f32.gmra.mrb[0].mxu0 %v1311
    %v1409 = vpop.f32.mrb[0].mxu0
    %v1410 = vadd.f32 %v267, %v1409
    %v1411 = vpop.f32.mrb[0].mxu0
    %1412 = vdwg.mxu0
    %v1413 = vsel %vm585, %v1390, -inf
    %1414 = vmax.xlane.f32.xlu0 %v1413
    %v1415 = vpop.xlane.xlu0 %1414
    %v1416 = vsel %vm585, %v1395, -inf
    %1417 = vmax.xlane.f32.xlu0 %v1416
    %v1418 = vpop.xlane.xlu0 %1417
    %v1419 = vsel %vm585, %v1400, -inf
    %1420 = vmax.xlane.f32.xlu0 %v1419
    %v1421 = vpop.xlane.xlu0 %1420
    %v1422 = vsel %vm585, %v1405, -inf
    %1423 = vmax.xlane.f32.xlu0 %v1422
    %v1424 = vpop.xlane.xlu0 %1423
    %v1425 = vsel %vm585, %v1410, -inf
    %1426 = vmax.xlane.f32.xlu0 %v1425
    %v1427 = vpop.xlane.xlu0 %1426
    %v1428 = vsub.f32 %v1390, %v1415
    %v1429 = vsub.f32 %v1395, %v1418
    %v1430 = vsub.f32 %v1400, %v1421
    %v1431 = vsub.f32 %v1405, %v1424
    %v1432 = vsub.f32 %v1410, %v1427
    %v1433 = vmul.f32 %v1428, 1.442695
    %v1434 = vpow.pop %v1433
    %v1435 = vmul.f32 %v1429, 1.442695
    %v1436 = vpow.pop %v1435
    %v1437 = vmul.f32 %v1430, 1.442695
    %v1438 = vpow.pop %v1437
    %v1439 = vmul.f32 %v1431, 1.442695
    %v1440 = vpow.pop %v1439
    %v1441 = vmul.f32 %v1432, 1.442695
    %v1442 = vpow.pop %v1441
    %v1443 = vsel %vm585, %v1434, 0.0
    %1444 = vadd.xlane.f32.xlu0 %v1443
    %v1445 = vpop.xlane.xlu0 %1444
    %v1446 = vsel %vm585, %v1436, 0.0
    %1447 = vadd.xlane.f32.xlu0 %v1446
    %v1448 = vpop.xlane.xlu0 %1447
    %v1449 = vsel %vm585, %v1438, 0.0
    %1450 = vadd.xlane.f32.xlu0 %v1449
    %v1451 = vpop.xlane.xlu0 %1450
    %v1452 = vsel %vm585, %v1440, 0.0
    %1453 = vadd.xlane.f32.xlu0 %v1452
    %v1454 = vpop.xlane.xlu0 %1453
    %v1455 = vsel %vm585, %v1442, 0.0
    %1456 = vadd.xlane.f32.xlu0 %v1455
    %v1457 = vpop.xlane.xlu0 %1456
    %v1458 = vrcp.pop %v1445
    %v1459 = vrcp.pop %v1448
    %v1460 = vrcp.pop %v1451
    %v1461 = vrcp.pop %v1454
    %v1462 = vrcp.pop %v1457
    %v1463 = vmul.f32 %v1434, %v1458
    %v1464 = vmul.f32 %v1436, %v1459
    %v1465 = vmul.f32 %v1438, %v1460
    %v1466 = vmul.f32 %v1440, %v1461
    %v1467 = vmul.f32 %v1442, %v1462
    %1473 = vrot.lane.b32.xlu0 %v1280, 64
    %v1474 = vpop.permute.xlu0 %1473
    %1475 = vrot.lane.b32.xlu0 %v1281, 64
    %v1476 = vpop.permute.xlu0 %1475
    %1477 = vrot.lane.b32.xlu0 %v1282, 64
    %v1478 = vpop.permute.xlu0 %1477
    %1479 = vrot.lane.b32.xlu0 %v1283, 64
    %v1480 = vpop.permute.xlu0 %1479
    %1481 = vrot.lane.b32.xlu0 %v1284, 64
    %v1482 = vpop.permute.xlu0 %1481
    %v1489 = vsel %vm585, %v1463, 0
    %v1492 = vsel %vm585, %v1464, 0
    %v1495 = vsel %vm585, %v1465, 0
    %v1498 = vsel %vm585, %v1466, 0
    %v1501 = vsel %vm585, %v1467, 0
    %1503 = vmatprep.subr.mxu0 0.0
    %1504 = vmatpush1.msra.mxu0 %v1474
    %1505 = vmatprep.subr.mxu0 0.0
    %1506 = vmatpush1.msra.mxu0 %v1476
    %1507 = vmatprep.subr.mxu0 0.0
    %1508 = vmatpush1.msra.mxu0 %v1478
    %1509 = vmatprep.subr.mxu0 0.0
    %1510 = vmatpush1.msra.mxu0 %v1480
    %1511 = vmatprep.subr.mxu0 0.0
    %1512 = vmatpush1.msra.mxu0 %v1482
    %1513 = vmatprep.subr.mxu0 0.0
    %1514 = vmatpush1.msra.mxu0 0.0
    %1515 = vmatprep.subr.mxu0 0.0
    %1516 = vmatpush1.msra.mxu0 0.0
    %1517 = vmatprep.subr.mxu0 0.0
    %1518 = vmatpush1.msra.mxu0 0.0
    %1519 = vmatprep.subr.mxu0 0.0
    %1520 = vmatpush1.msra.mxu0 0.0
    %1521 = vmatprep.subr.mxu0 0.0
    %1522 = vmatpush1.msra.mxu0 0.0
    %1523 = vmatprep.subr.mxu0 0.0
    %1524 = vmatpush1.msra.mxu0 0.0
    %1525 = vmatprep.subr.mxu0 0.0
    %1526 = vmatpush1.msra.mxu0 0.0
    %1527 = vmatprep.subr.mxu0 0.0
    %1528 = vmatpush1.msra.mxu0 0.0
    %1529 = vmatprep.subr.mxu0 0.0
    %1530 = vmatpush1.msra.mxu0 0.0
    %1531 = vmatprep.subr.mxu0 0.0
    %1532 = vmatpush1.msra.mxu0 0.0
    %1533 = vmatprep.subr.mxu0 0.0
    %1534 = vmatpush1.msra.mxu0 0.0
    %1535 = vmatprep.subr.mxu0 0.0
    %1536 = vmatpush1.msra.mxu0 0.0
    %1537 = vmatprep.subr.mxu0 0.0
    %1538 = vmatpush1.msra.mxu0 0.0
    %1539 = vmatprep.subr.mxu0 0.0
    %1540 = vmatpush1.msra.mxu0 0.0
    %1541 = vmatprep.subr.mxu0 0.0
    %1542 = vmatpush1.msra.mxu0 0.0
    %1543 = vmatprep.subr.mxu0 0.0
    %1544 = vmatpush1.msra.mxu0 0.0
    %1545 = vmatprep.subr.mxu0 0.0
    %1546 = vmatpush1.msra.mxu0 0.0
    %1547 = vmatprep.subr.mxu0 0.0
    %1548 = vmatpush1.msra.mxu0 0.0
    %1549 = vmatprep.subr.mxu0 0.0
    %1550 = vmatpush1.msra.mxu0 0.0
    %1551 = vmatprep.subr.mxu0 0.0
    %1552 = vmatpush1.msra.mxu0 0.0
    %1553 = vmatprep.subr.mxu0 0.0
    %1554 = vmatpush1.msra.mxu0 0.0
    %1555 = vmatprep.subr.mxu0 0.0
    %1556 = vmatpush1.msra.mxu0 0.0
    %1557 = vmatprep.subr.mxu0 0.0
    %1558 = vmatpush1.msra.mxu0 0.0
    %1559 = vmatprep.subr.mxu0 0.0
    %1560 = vmatpush1.msra.mxu0 0.0
    %1561 = vmatprep.subr.mxu0 0.0
    %1562 = vmatpush1.msra.mxu0 0.0
    %1563 = vmatprep.subr.mxu0 0.0
    %1564 = vmatpush1.msra.mxu0 0.0
    %1565 = vmatprep.subr.mxu0 0.0
    %1566 = vmatpush1.msra.mxu0 0.0
    %1567 = vmatprep.mubr.f32.mxu0 0.0
    %1568 = vmatmul.mubr.f32.gmra.mrb[0].mxu0 %v1489
    %v1569 = vpop.f32.mrb[0].mxu0
    %v1570 = vadd.f32 0.0, %v1569
    %v1571 = vpop.f32.mrb[0].mxu0
    %1572 = vmatprep.mubr.f32.mxu0 0.0
    %1573 = vmatmul.mubr.f32.gmra.mrb[0].mxu0 %v1492
    %v1574 = vpop.f32.mrb[0].mxu0
    %v1575 = vadd.f32 0.0, %v1574
    %v1576 = vpop.f32.mrb[0].mxu0
    %1577 = vmatprep.mubr.f32.mxu0 0.0
    %1578 = vmatmul.mubr.f32.gmra.mrb[0].mxu0 %v1495
    %v1579 = vpop.f32.mrb[0].mxu0
    %v1580 = vadd.f32 0.0, %v1579
    %v1581 = vpop.f32.mrb[0].mxu0
    %1582 = vmatprep.mubr.f32.mxu0 0.0
    %1583 = vmatmul.mubr.f32.gmra.mrb[0].mxu0 %v1498
    %v1584 = vpop.f32.mrb[0].mxu0
    %v1585 = vadd.f32 0.0, %v1584
    %v1586 = vpop.f32.mrb[0].mxu0
    %1587 = vmatprep.mubr.f32.mxu0 0.0
    %1588 = vmatmul.mubr.f32.gmra.mrb[0].mxu0 %v1501
    %v1589 = vpop.f32.mrb[0].mxu0
    %v1590 = vadd.f32 0.0, %v1589
    %v1591 = vpop.f32.mrb[0].mxu0
    %1592 = vdwg.mxu0
    %v1595 = vrot.slane %v1575, 2
    %v1596 = vrot.slane %v1580, 2
    %v1597 = vsel %vm418, %v1595, %v1596
    %v1600 = vadd.f32 %v1570, %v1597
    %v1601 = vadd.f32 %v1575, %v1596
    %v1603 = vrot.slane %v1580, 4
    %v1604 = vrot.slane %v1585, 4
    %v1605 = vsel %vm412, %v1603, %v1604
    %v1608 = vadd.f32 %v1600, %v1605
    %v1609 = vadd.f32 %v1601, %v1604
    %v1611 = vrot.slane %v1585, 6
    %v1612 = vrot.slane %v1590, 6
    %v1613 = vsel %vm406, %v1611, %v1612
    %v1616 = vadd.f32 %v1608, %v1613
    %v1617 = vadd.f32 %v1609, %v1612
    %v1619 = vsel %vm217, %v1616, 0
    %v1622 = vsel %vm217, %v1617, 0
    %1624 = vmatprep.subr.mxu0 0.0
    %1625 = vmatpush1.msra.mxu0 %v1123
    %1626 = vmatprep.subr.mxu0 0.0
    %1627 = vmatpush1.msra.mxu0 %v1124
    %1628 = vmatprep.subr.mxu0 0.0
    %1629 = vmatpush1.msra.mxu0 %v1125
    %1630 = vmatprep.subr.mxu0 0.0
    %1631 = vmatpush1.msra.mxu0 %v1126
    %1632 = vmatprep.subr.mxu0 0.0
    %1633 = vmatpush1.msra.mxu0 0.0
    %1634 = vmatprep.subr.mxu0 0.0
    %1635 = vmatpush1.msra.mxu0 0.0
    %1636 = vmatprep.subr.mxu0 0.0
    %1637 = vmatpush1.msra.mxu0 0.0
    %1638 = vmatprep.subr.mxu0 0.0
    %1639 = vmatpush1.msra.mxu0 0.0
    %1640 = vmatprep.subr.mxu0 0.0
    %1641 = vmatpush1.msra.mxu0 0.0
    %1642 = vmatprep.subr.mxu0 0.0
    %1643 = vmatpush1.msra.mxu0 0.0
    %1644 = vmatprep.subr.mxu0 0.0
    %1645 = vmatpush1.msra.mxu0 0.0
    %1646 = vmatprep.subr.mxu0 0.0
    %1647 = vmatpush1.msra.mxu0 0.0
    %1648 = vmatprep.subr.mxu0 0.0
    %1649 = vmatpush1.msra.mxu0 0.0
    %1650 = vmatprep.subr.mxu0 0.0
    %1651 = vmatpush1.msra.mxu0 0.0
    %1652 = vmatprep.subr.mxu0 0.0
    %1653 = vmatpush1.msra.mxu0 0.0
    %1654 = vmatprep.subr.mxu0 0.0
    %1655 = vmatpush1.msra.mxu0 0.0
    %1656 = vmatprep.subr.mxu0 0.0
    %1657 = vmatpush1.msra.mxu0 0.0
    %1658 = vmatprep.subr.mxu0 0.0
    %1659 = vmatpush1.msra.mxu0 0.0
    %1660 = vmatprep.subr.mxu0 0.0
    %1661 = vmatpush1.msra.mxu0 0.0
    %1662 = vmatprep.subr.mxu0 0.0
    %1663 = vmatpush1.msra.mxu0 0.0
    %1664 = vmatprep.subr.mxu0 0.0
    %1665 = vmatpush1.msra.mxu0 0.0
    %1666 = vmatprep.subr.mxu0 0.0
    %1667 = vmatpush1.msra.mxu0 0.0
    %1668 = vmatprep.subr.mxu0 0.0
    %1669 = vmatpush1.msra.mxu0 0.0
    %1670 = vmatprep.subr.mxu0 0.0
    %1671 = vmatpush1.msra.mxu0 0.0
    %1672 = vmatprep.subr.mxu0 0.0
    %1673 = vmatpush1.msra.mxu0 0.0
    %1674 = vmatprep.subr.mxu0 0.0
    %1675 = vmatpush1.msra.mxu0 0.0
    %1676 = vmatprep.subr.mxu0 0.0
    %1677 = vmatpush1.msra.mxu0 0.0
    %1678 = vmatprep.subr.mxu0 0.0
    %1679 = vmatpush1.msra.mxu0 0.0
    %1680 = vmatprep.subr.mxu0 0.0
    %1681 = vmatpush1.msra.mxu0 0.0
    %1682 = vmatprep.subr.mxu0 0.0
    %1683 = vmatpush1.msra.mxu0 0.0
    %1684 = vmatprep.subr.mxu0 0.0
    %1685 = vmatpush1.msra.mxu0 0.0
    %1686 = vmatprep.subr.mxu0 0.0
    %1687 = vmatpush1.msra.mxu0 0.0
    %1688 = vmatprep.mubr.f32.mxu0 0.0
    %1689 = vmatmul.mubr.f32.gmra.mrb[0].mxu0 %v1619
    %v1690 = vpop.f32.mrb[0].mxu0
    %v1691 = vadd.f32 0.0, %v1690
    %v1692 = vpop.f32.mrb[0].mxu0
    %1693 = vmatprep.mubr.f32.mxu0 0.0
    %1694 = vmatmul.mubr.f32.gmra.mrb[0].mxu0 %v1622
    %v1695 = vpop.f32.mrb[0].mxu0
    %v1696 = vadd.f32 0.0, %v1695
    %v1697 = vpop.f32.mrb[0].mxu0
    %1698 = vdwg.mxu0
    %v1699 = vadd.f32 %v1116, %v1691
    %v1700 = vadd.f32 %v1117, %v1696
    %v1701 = vlaneseq
    %v1702 = vshrl.u32 %v1701, 7
    %v1703 = vsub.s32 5, %v1702
    %v1704 = vrot.slane %v1131, %v1703
    %v1705 = vadd.f32 %v1699, %v1704
    %v1706 = vadd.f32 %v1700, %v1704
    %v1707 = vsel %vm217, %v1705, 0.0
    %1708 = vadd.xlane.f32.xlu0 %v1707
    %v1709 = vpop.xlane.xlu0 %1708
    %v1710 = vsel %vm221, %v1706, 0.0
    %1711 = vadd.xlane.f32.xlu0 %v1710
    %v1712 = vpop.xlane.xlu0 %1711
    %v1713 = vmul.f32 %v1709, %v225
    %v1714 = vmul.f32 %v1712, %v225
    %v1715 = vsub.f32 %v1705, %v1713
    %v1716 = vsub.f32 %v1706, %v1714
    %v1717 = vmul.f32 %v1715, %v1715
    %v1718 = vmul.f32 %v1716, %v1716
    %v1719 = vsel %vm217, %v1717, 0.0
    %1720 = vadd.xlane.f32.xlu0 %v1719
    %v1721 = vpop.xlane.xlu0 %1720
    %v1722 = vsel %vm221, %v1718, 0.0
    %1723 = vadd.xlane.f32.xlu0 %v1722
    %v1724 = vpop.xlane.xlu0 %1723
    %v1725 = vmul.f32 %v1721, %v225
    %v1726 = vmul.f32 %v1724, %v225
    %v1727 = vadd.f32 %v1725, 1e-05
    %v1728 = vadd.f32 %v1726, 1e-05
    %v1729 = vrsqrt.pop %v1727
    %v1730 = vrsqrt.pop %v1728
    %v1731 = vmul.f32 %v1715, %v1729
    %v1732 = vmul.f32 %v1716, %v1730
    %v1733 = vlaneseq
    %v1734 = vshrl.u32 %v1733, 7
    %v1735 = vsub.s32 2, %v1734
    %v1736 = vrot.slane %v1131, %v1735
    %v1737 = vmul.f32 %v1731, %v1736
    %v1738 = vmul.f32 %v1732, %v1736
    %v1739 = vlaneseq
    %v1740 = vshrl.u32 %v1739, 7
    %v1741 = vsub.s32 3, %v1740
    %v1742 = vrot.slane %v1131, %v1741
    %v1743 = vadd.f32 %v1737, %v1742
    %v1744 = vadd.f32 %v1738, %v1742
    %v1745 = vlaneseq
    %v1746 = vshrl.u32 %v1745, 7
    %v1747 = vsub.s32 6, %v1746
    %v1748 = vrot.slane %v1131, %v1747
    %v1750 = vsel %vm217, %v1743, 0
    %v1753 = vsel %vm217, %v1744, 0
    %1755 = vmatprep.subr.mxu0 0.0
    %1756 = vmatpush1.msra.mxu0 %v1127
    %1757 = vmatprep.subr.mxu0 0.0
    %1758 = vmatpush1.msra.mxu0 %v1128
    %1759 = vmatprep.subr.mxu0 0.0
    %1760 = vmatpush1.msra.mxu0 %v1129
    %1761 = vmatprep.subr.mxu0 0.0
    %1762 = vmatpush1.msra.mxu0 %v1130
    %1763 = vmatprep.subr.mxu0 0.0
    %1764 = vmatpush1.msra.mxu0 0.0
    %1765 = vmatprep.subr.mxu0 0.0
    %1766 = vmatpush1.msra.mxu0 0.0
    %1767 = vmatprep.subr.mxu0 0.0
    %1768 = vmatpush1.msra.mxu0 0.0
    %1769 = vmatprep.subr.mxu0 0.0
    %1770 = vmatpush1.msra.mxu0 0.0
    %1771 = vmatprep.subr.mxu0 0.0
    %1772 = vmatpush1.msra.mxu0 0.0
    %1773 = vmatprep.subr.mxu0 0.0
    %1774 = vmatpush1.msra.mxu0 0.0
    %1775 = vmatprep.subr.mxu0 0.0
    %1776 = vmatpush1.msra.mxu0 0.0
    %1777 = vmatprep.subr.mxu0 0.0
    %1778 = vmatpush1.msra.mxu0 0.0
    %1779 = vmatprep.subr.mxu0 0.0
    %1780 = vmatpush1.msra.mxu0 0.0
    %1781 = vmatprep.subr.mxu0 0.0
    %1782 = vmatpush1.msra.mxu0 0.0
    %1783 = vmatprep.subr.mxu0 0.0
    %1784 = vmatpush1.msra.mxu0 0.0
    %1785 = vmatprep.subr.mxu0 0.0
    %1786 = vmatpush1.msra.mxu0 0.0
    %1787 = vmatprep.subr.mxu0 0.0
    %1788 = vmatpush1.msra.mxu0 0.0
    %1789 = vmatprep.subr.mxu0 0.0
    %1790 = vmatpush1.msra.mxu0 0.0
    %1791 = vmatprep.subr.mxu0 0.0
    %1792 = vmatpush1.msra.mxu0 0.0
    %1793 = vmatprep.subr.mxu0 0.0
    %1794 = vmatpush1.msra.mxu0 0.0
    %1795 = vmatprep.subr.mxu0 0.0
    %1796 = vmatpush1.msra.mxu0 0.0
    %1797 = vmatprep.subr.mxu0 0.0
    %1798 = vmatpush1.msra.mxu0 0.0
    %1799 = vmatprep.subr.mxu0 0.0
    %1800 = vmatpush1.msra.mxu0 0.0
    %1801 = vmatprep.subr.mxu0 0.0
    %1802 = vmatpush1.msra.mxu0 0.0
    %1803 = vmatprep.subr.mxu0 0.0
    %1804 = vmatpush1.msra.mxu0 0.0
    %1805 = vmatprep.subr.mxu0 0.0
    %1806 = vmatpush1.msra.mxu0 0.0
    %1807 = vmatprep.subr.mxu0 0.0
    %1808 = vmatpush1.msra.mxu0 0.0
    %1809 = vmatprep.subr.mxu0 0.0
    %1810 = vmatpush1.msra.mxu0 0.0
    %1811 = vmatprep.subr.mxu0 0.0
    %1812 = vmatpush1.msra.mxu0 0.0
    %1813 = vmatprep.subr.mxu0 0.0
    %1814 = vmatpush1.msra.mxu0 0.0
    %1815 = vmatprep.subr.mxu0 0.0
    %1816 = vmatpush1.msra.mxu0 0.0
    %1817 = vmatprep.subr.mxu0 0.0
    %1818 = vmatpush1.msra.mxu0 0.0
    %1819 = vmatprep.mubr.f32.mxu0 0.0
    %1820 = vmatmul.mubr.f32.gmra.mrb[0].mxu0 %v1750
    %v1821 = vpop.f32.mrb[0].mxu0
    %v1822 = vadd.f32 %v1748, %v1821
    %v1823 = vpop.f32.mrb[0].mxu0
    %1824 = vmatprep.mubr.f32.mxu0 0.0
    %1825 = vmatmul.mubr.f32.gmra.mrb[0].mxu0 %v1753
    %v1826 = vpop.f32.mrb[0].mxu0
    %v1827 = vadd.f32 %v1748, %v1826
    %v1828 = vpop.f32.mrb[0].mxu0
    %1829 = vdwg.mxu0
    %v1830 = vmul.f32 %v1822, %v1822
    %v1831 = vmul.f32 %v1827, %v1827
    %v1832 = vmul.f32 %v1822, %v1830
    %v1833 = vmul.f32 %v1827, %v1831
    %v1834 = vmul.f32 %v1832, 0.044715
    %v1835 = vmul.f32 %v1833, 0.044715
    %v1836 = vadd.f32 %v1822, %v1834
    %v1837 = vadd.f32 %v1827, %v1835
    %v1838 = vmul.f32 %v1836, 0.7978846
    %v1839 = vmul.f32 %v1837, 0.7978846
    %v1840 = vtanh.pop %v1838
    %v1841 = vtanh.pop %v1839
    %v1842 = vadd.f32 %v1840, 1.0
    %v1843 = vadd.f32 %v1841, 1.0
    %v1844 = vmul.f32 %v1842, 0.5
    %v1845 = vmul.f32 %v1843, 0.5
    %v1846 = vmul.f32 %v1822, %v1844
    %v1847 = vmul.f32 %v1827, %v1845
    %s1848 = scalar_lea.vmem %s3, 128
    %v1849 = vld [vmem:[%s1848] sm:$0xff]
    %v1850 = vld [vmem:[%s1848 + $0x8] sm:$0xff]
    %v1851 = vld [vmem:[%s1848 + $0x10] sm:$0xff]
    %v1852 = vld [vmem:[%s1848 + $0x18] sm:$0xff]
    %v1853 = vld [vmem:[%s1848 + $0x20] sm:$0xff]
    %v1854 = vld [vmem:[%s1848 + $0x28] sm:$0xff]
    %v1855 = vld [vmem:[%s1848 + $0x30] sm:$0xff]
    %v1856 = vld [vmem:[%s1848 + $0x38] sm:$0xff]
    %v1857 = vld [vmem:[%s1848 + $0x40] sm:$0xff]
    %v1858 = vld [vmem:[%s1848 + $0x48] sm:$0xff]
    %v1859 = vld [vmem:[%s1848 + $0x50] sm:$0xff]
    %v1860 = vld [vmem:[%s1848 + $0x58] sm:$0xff]
    %v1861 = vld [vmem:[%s1848 + $0x60] sm:$0xff]
    %v1862 = vld [vmem:[%s1848 + $0x68] sm:$0xff]
    %v1863 = vld [vmem:[%s1848 + $0x70] sm:$0xff]
    %v1864 = vld [vmem:[%s1848 + $0x78] sm:$0xff]
    %v1865 = vlaneseq
    %v1866 = vshrl.u32 %v1865, 7
    %v1867 = vsub.s32 7, %v1866
    %v1868 = vrot.slane %v1131, %v1867
    %1869 = vmatprep.subr.mxu0 0.0
    %1870 = vmatpush1.msra.mxu0 %v1849
    %1871 = vmatprep.subr.mxu0 0.0
    %1872 = vmatpush1.msra.mxu0 %v1850
    %1873 = vmatprep.subr.mxu0 0.0
    %1874 = vmatpush1.msra.mxu0 %v1851
    %1875 = vmatprep.subr.mxu0 0.0
    %1876 = vmatpush1.msra.mxu0 %v1852
    %1877 = vmatprep.subr.mxu0 0.0
    %1878 = vmatpush1.msra.mxu0 %v1853
    %1879 = vmatprep.subr.mxu0 0.0
    %1880 = vmatpush1.msra.mxu0 %v1854
    %1881 = vmatprep.subr.mxu0 0.0
    %1882 = vmatpush1.msra.mxu0 %v1855
    %1883 = vmatprep.subr.mxu0 0.0
    %1884 = vmatpush1.msra.mxu0 %v1856
    %1885 = vmatprep.subr.mxu0 0.0
    %1886 = vmatpush1.msra.mxu0 %v1857
    %1887 = vmatprep.subr.mxu0 0.0
    %1888 = vmatpush1.msra.mxu0 %v1858
    %1889 = vmatprep.subr.mxu0 0.0
    %1890 = vmatpush1.msra.mxu0 %v1859
    %1891 = vmatprep.subr.mxu0 0.0
    %1892 = vmatpush1.msra.mxu0 %v1860
    %1893 = vmatprep.subr.mxu0 0.0
    %1894 = vmatpush1.msra.mxu0 %v1861
    %1895 = vmatprep.subr.mxu0 0.0
    %1896 = vmatpush1.msra.mxu0 %v1862
    %1897 = vmatprep.subr.mxu0 0.0
    %1898 = vmatpush1.msra.mxu0 %v1863
    %1899 = vmatprep.subr.mxu0 0.0
    %1900 = vmatpush1.msra.mxu0 %v1864
    %1901 = vmatprep.subr.mxu0 0.0
    %1902 = vmatpush1.msra.mxu0 0.0
    %1903 = vmatprep.subr.mxu0 0.0
    %1904 = vmatpush1.msra.mxu0 0.0
    %1905 = vmatprep.subr.mxu0 0.0
    %1906 = vmatpush1.msra.mxu0 0.0
    %1907 = vmatprep.subr.mxu0 0.0
    %1908 = vmatpush1.msra.mxu0 0.0
    %1909 = vmatprep.subr.mxu0 0.0
    %1910 = vmatpush1.msra.mxu0 0.0
    %1911 = vmatprep.subr.mxu0 0.0
    %1912 = vmatpush1.msra.mxu0 0.0
    %1913 = vmatprep.subr.mxu0 0.0
    %1914 = vmatpush1.msra.mxu0 0.0
    %1915 = vmatprep.subr.mxu0 0.0
    %1916 = vmatpush1.msra.mxu0 0.0
    %1917 = vmatprep.subr.mxu0 0.0
    %1918 = vmatpush1.msra.mxu0 0.0
    %1919 = vmatprep.subr.mxu0 0.0
    %1920 = vmatpush1.msra.mxu0 0.0
    %1921 = vmatprep.subr.mxu0 0.0
    %1922 = vmatpush1.msra.mxu0 0.0
    %1923 = vmatprep.subr.mxu0 0.0
    %1924 = vmatpush1.msra.mxu0 0.0
    %1925 = vmatprep.subr.mxu0 0.0
    %1926 = vmatpush1.msra.mxu0 0.0
    %1927 = vmatprep.subr.mxu0 0.0
    %1928 = vmatpush1.msra.mxu0 0.0
    %1929 = vmatprep.subr.mxu0 0.0
    %1930 = vmatpush1.msra.mxu0 0.0
    %1931 = vmatprep.subr.mxu0 0.0
    %1932 = vmatpush1.msra.mxu0 0.0
    %1933 = vmatprep.mubr.f32.mxu0 0.0
    %1934 = vmatmul.mubr.f32.gmra.mrb[0].mxu0 %v1846
    %v1935 = vpop.f32.mrb[0].mxu0
    %v1936 = vadd.f32 %v1868, %v1935
    %v1937 = vpop.f32.mrb[0].mxu0
    %1938 = vmatprep.mubr.f32.mxu0 0.0
    %1939 = vmatmul.mubr.f32.gmra.mrb[0].mxu0 %v1847
    %v1940 = vpop.f32.mrb[0].mxu0
    %v1941 = vpop.f32.mrb[0].mxu0
    %1942 = vdwg.mxu0
    %v1943 = vadd.f32 %v1705, %v1936
    %v1944 = vsel %vm221, %v1943, 0.0
    %1945 = vadd.xlane.f32.xlu0 %v1944
    %v1946 = vpop.xlane.xlu0 %1945
    %v1947 = vmul.f32 %v1946, %v225
    %v1948 = vsub.f32 %v1943, %v1947
    %v1949 = vmul.f32 %v1948, %v1948
    %v1950 = vsel %vm221, %v1949, 0.0
    %1951 = vadd.xlane.f32.xlu0 %v1950
    %v1952 = vpop.xlane.xlu0 %1951
    %v1953 = vmul.f32 %v1952, %v225
    %v1954 = vadd.f32 %v1953, 1e-05
    %v1955 = vrsqrt.pop %v1954
    %v1956 = vmul.f32 %v1948, %v1955
    %v1957 = vlaneseq
    %v1958 = vshrl.u32 %v1957, 7
    %v1959 = vsub.s32 0, %v1958
    %v1960 = vrot.slane %v215, %v1959
    %v1961 = vmul.f32 %v1956, %v1960
    %v1962 = vlaneseq
    %v1963 = vshrl.u32 %v1962, 7
    %v1964 = vsub.s32 0, %v1963
    %v1965 = vrot.slane %v216, %v1964
    %v1966 = vadd.f32 %v1961, %v1965
    %v1967 = vld [vmem:[%s1 + $0x68] sm:$0xff]
    %v1968 = vld [vmem:[%s1 + $0x70] sm:$0xff]
    %v1969 = vld [vmem:[%s1 + $0x78] sm:$0xff]
    %v1970 = vld [vmem:[%s1 + $0x80] sm:$0xff]
    %v1972 = vsel %vm217, %v1966, 0
    %1974 = vmatprep.subr.mxu0 0.0
    %1975 = vmatpush1.msra.mxu0 %v1967
    %1976 = vmatprep.subr.mxu0 0.0
    %1977 = vmatpush1.msra.mxu0 %v1968
    %1978 = vmatprep.subr.mxu0 0.0
    %1979 = vmatpush1.msra.mxu0 %v1969
    %1980 = vmatprep.subr.mxu0 0.0
    %1981 = vmatpush1.msra.mxu0 %v1970
    %1982 = vmatprep.subr.mxu0 0.0
    %1983 = vmatpush1.msra.mxu0 0.0
    %1984 = vmatprep.subr.mxu0 0.0
    %1985 = vmatpush1.msra.mxu0 0.0
    %1986 = vmatprep.subr.mxu0 0.0
    %1987 = vmatpush1.msra.mxu0 0.0
    %1988 = vmatprep.subr.mxu0 0.0
    %1989 = vmatpush1.msra.mxu0 0.0
    %1990 = vmatprep.subr.mxu0 0.0
    %1991 = vmatpush1.msra.mxu0 0.0
    %1992 = vmatprep.subr.mxu0 0.0
    %1993 = vmatpush1.msra.mxu0 0.0
    %1994 = vmatprep.subr.mxu0 0.0
    %1995 = vmatpush1.msra.mxu0 0.0
    %1996 = vmatprep.subr.mxu0 0.0
    %1997 = vmatpush1.msra.mxu0 0.0
    %1998 = vmatprep.subr.mxu0 0.0
    %1999 = vmatpush1.msra.mxu0 0.0
    %2000 = vmatprep.subr.mxu0 0.0
    %2001 = vmatpush1.msra.mxu0 0.0
    %2002 = vmatprep.subr.mxu0 0.0
    %2003 = vmatpush1.msra.mxu0 0.0
    %2004 = vmatprep.subr.mxu0 0.0
    %2005 = vmatpush1.msra.mxu0 0.0
    %2006 = vmatprep.subr.mxu0 0.0
    %2007 = vmatpush1.msra.mxu0 0.0
    %2008 = vmatprep.subr.mxu0 0.0
    %2009 = vmatpush1.msra.mxu0 0.0
    %2010 = vmatprep.subr.mxu0 0.0
    %2011 = vmatpush1.msra.mxu0 0.0
    %2012 = vmatprep.subr.mxu0 0.0
    %2013 = vmatpush1.msra.mxu0 0.0
    %2014 = vmatprep.subr.mxu0 0.0
    %2015 = vmatpush1.msra.mxu0 0.0
    %2016 = vmatprep.subr.mxu0 0.0
    %2017 = vmatpush1.msra.mxu0 0.0
    %2018 = vmatprep.subr.mxu0 0.0
    %2019 = vmatpush1.msra.mxu0 0.0
    %2020 = vmatprep.subr.mxu0 0.0
    %2021 = vmatpush1.msra.mxu0 0.0
    %2022 = vmatprep.subr.mxu0 0.0
    %2023 = vmatpush1.msra.mxu0 0.0
    %2024 = vmatprep.subr.mxu0 0.0
    %2025 = vmatpush1.msra.mxu0 0.0
    %2026 = vmatprep.subr.mxu0 0.0
    %2027 = vmatpush1.msra.mxu0 0.0
    %2028 = vmatprep.subr.mxu0 0.0
    %2029 = vmatpush1.msra.mxu0 0.0
    %2030 = vmatprep.subr.mxu0 0.0
    %2031 = vmatpush1.msra.mxu0 0.0
    %2032 = vmatprep.subr.mxu0 0.0
    %2033 = vmatpush1.msra.mxu0 0.0
    %2034 = vmatprep.subr.mxu0 0.0
    %2035 = vmatpush1.msra.mxu0 0.0
    %2036 = vmatprep.subr.mxu0 0.0
    %2037 = vmatpush1.msra.mxu0 0.0
    %2038 = vmatprep.mubr.f32.mxu0 0.0
    %2039 = vmatmul.mubr.f32.gmra.mrb[0].mxu0 %v1972
    %v2040 = vpop.f32.mrb[0].mxu0
    %v2041 = vadd.f32 0.0, %v2040
    %v2042 = vpop.f32.mrb[0].mxu0
    %2043 = vdwg.mxu0
    %vm2044 = vcmask 189440
    %2045 = vst.msk [vmem:[#allocation7] sm:$0x3] %vm2044, %v2041
    // Predicated region
    $region22: #{clip_image_embed.2} parent=1 // pred_check
      _
    $region23: #{clip_image_embed.2} parent=1 // pred_check_branch
      %2047 = sbr.rel (0) target = $region25
    $region24: #{clip_image_embed.2} parent=1 // pred_region
      %s2049 = ssub.s32 32, 32
      %2050 = vsyncadd [#allocation8], %s2049
      %s2052 = sshll.u32 [#allocation7], 4
      %s2053 = int_to_ptr.vmem [resolvable:$true] %s2052
      %2055 = dma.vmem_to_hbm [thread:$0]  %s2053, 32, %s6, [#allocation8]
    $region25: #{clip_image_embed.2} parent=1 // pred_fallthru
      _
    // Predicated region
    $region26: #{clip_image_embed.2} parent=1 // pred_check
      _
    $region27: #{clip_image_embed.2} parent=1 // pred_check_branch
      %2057 = sbr.rel (0) target = $region29
    $region28: #{clip_image_embed.2} parent=1 // pred_region
      %2058 = dma.done [#allocation8], 32
    $region29: #{clip_image_embed.2} parent=1 // pred_fallthru
      _
    %2059 = vsyncpa [#allocation8], 1

</llo_original>
